<compile_context>
chip_gen: v7x
topology: tpu7x:2x2x1
jax: 0.10.0
libtpu: 0.0.40
codegen_flags: <defaults>
</compile_context>

<pallas_src>
import jax
import jax.numpy as jnp
import numpy as np
from jax.experimental import pallas as pl
from jax.experimental.pallas import tpu as pltpu


def _se_pw_kernel(x_ref, w1t_ref, b1_ref, w2t_ref, b2_ref, wpw_ref, bpw_ref,
                  o_ref, pooled_ref, weff_ref):
    """Two-pass fused SE gate + (gate-folded) 1x1 conv + folded BN.

    Grid: (B, 2, n_t) = (batch, pass, spatial tile).

    x_ref  : (1, C, TS)    activation tile (I/O dtype), TS multiple of 128
    w1t_ref: (C, mid)      SE squeeze weight, pre-transposed, 1/S folded in
    b1_ref : (1, mid)      SE squeeze bias
    w2t_ref: (mid, C)      SE excite weight, pre-transposed, * 1/6 folded
    b2_ref : (1, C)        SE excite bias * 1/6 + 0.5 folded (hardsigmoid)
    wpw_ref: (Cout, C)     1x1 conv weight with BN scale folded in (f32)
    bpw_ref: (Cout, 1)     folded BN shift (f32)
    o_ref  : (1, Cout, TS) output tile (I/O dtype)
    pooled_ref: (1, C) f32       running spatial sum (per batch element)
    weff_ref  : (Cout, C) cdtype gate-folded weight (per batch element)
    """
    p = pl.program_id(1)
    t = pl.program_id(2)
    n_t = pl.num_programs(2)

    # ---------------- pass 0: pooled sum + gate-folded weight ----------------
    @pl.when(p == 0)
    def _pass0():
        @pl.when(t == 0)
        def _():
            pooled_ref[...] = jnp.zeros_like(pooled_ref)

        # f32 accumulation of the spatial sum (only place x is upcast).
        xt = x_ref[...].astype(jnp.float32)                   # (1, C, TS)
        pooled_ref[...] += jnp.sum(xt, axis=-1)                # (1, C)

        @pl.when(t == n_t - 1)
        def _finish():
            pooled = pooled_ref[...]                           # (1, C), sum; 1/S in w1t
            h = jnp.dot(pooled, w1t_ref[...],
                        preferred_element_type=jnp.float32) + b1_ref[...]
            h = jnp.maximum(h, 0.0)                            # (1, mid) ReLU
            g = jnp.dot(h, w2t_ref[...],
                        preferred_element_type=jnp.float32) + b2_ref[...]
            g = jnp.clip(g, 0.0, 1.0)                          # (1, C) hardsigmoid
            # W_pw @ (x*g) == (W_pw*g) @ x : fold gate into weight columns,
            # once per batch element (hoisted out of the spatial-tile loop).
            weff_ref[...] = (wpw_ref[...] * g).astype(weff_ref.dtype)

    # ---------------- pass 1: gated pointwise conv + folded BN ----------------
    @pl.when(p == 1)
    def _pass1():
        xt = x_ref[...]                                        # (1, C, TS), I/O dtype
        acc = jnp.dot(weff_ref[...], xt[0],
                      preferred_element_type=jnp.float32)       # (Cout, TS) f32 acc
        o_ref[0] = (acc + bpw_ref[...]).astype(o_ref.dtype)


def _pick_spatial_tile(S, max_tile):
    cand = max(128, (min(S, max_tile) // 128) * 128)
    while S % cand:
        cand -= 128
    return cand


def se_pointwise_block(x, w1, b1, w2, b2, w_pw,
                       bn_gamma, bn_beta, bn_mean, bn_var, *,
                       bn_eps=1e-3, max_spatial_tile=2048):
    """SEblock(C, mid) -> Conv2d(1x1, bias=False) -> BatchNorm2d(eval), i.e.
    the tail of each DSConv / DeConv stage of Mobile_Water_Net.

    x: (B, C, H, W); returns (B, Cout, H, W) in x.dtype (bf16 I/O recommended
    on all TPU generations: the op is HBM-bandwidth bound; all accumulation
    stays f32 inside the kernel).
    """
    B, C, H, W = x.shape
    S = H * W
    mid = w1.shape[0]
    Cout = w_pw.shape[0]
    assert S % 128 == 0, "flattened spatial axis must be lane-dense (mult of 128)"
    assert C % 8 == 0 and Cout % 8 == 0

    TS = _pick_spatial_tile(S, max_spatial_tile)
    n_t = S // TS

    f32 = jnp.float32
    # ---- trace-time constant folding (free at runtime) ----
    # AdaptiveAvgPool2d(1): 1/S folded into the SE squeeze weight.
    w1t_f = (w1.astype(f32) * (1.0 / S)).T                     # (C, mid)
    b1_f = b1.astype(f32).reshape(1, mid)
    # Hardsigmoid(z) = clip(z/6 + 0.5, 0, 1): fold 1/6 and +0.5 into conv2.
    w2t_f = (w2.astype(f32) * (1.0 / 6.0)).T                   # (mid, C)
    b2_f = (b2.astype(f32) * (1.0 / 6.0) + 0.5).reshape(1, C)
    # BatchNorm (eval) folded into the 1x1 conv: scale rows of W, shift bias.
    scale = bn_gamma.astype(f32) * jax.lax.rsqrt(bn_var.astype(f32) + bn_eps)
    wpw_f = w_pw.astype(f32) * scale[:, None]                  # (Cout, C)
    bpw_f = (bn_beta.astype(f32) - bn_mean.astype(f32) * scale).reshape(Cout, 1)

    # NCHW row-major flatten of the spatial dims; lane (last) dim is S = H*W.
    x_p = x.reshape(B, C, S)

    out = pl.pallas_call(
        _se_pw_kernel,
        out_shape=jax.ShapeDtypeStruct((B, Cout, S), x.dtype),
        grid_spec=pltpu.PrefetchScalarGridSpec(
            num_scalar_prefetch=0,
            grid=(B, 2, n_t),                 # (batch, pass, spatial tile)
            in_specs=[
                pl.BlockSpec((1, C, TS), lambda b, p, t: (b, 0, t)),
                pl.BlockSpec((C, mid),   lambda b, p, t: (0, 0)),
                pl.BlockSpec((1, mid),   lambda b, p, t: (0, 0)),
                pl.BlockSpec((mid, C),   lambda b, p, t: (0, 0)),
                pl.BlockSpec((1, C),     lambda b, p, t: (0, 0)),
                pl.BlockSpec((Cout, C),  lambda b, p, t: (0, 0)),
                pl.BlockSpec((Cout, 1),  lambda b, p, t: (0, 0)),
            ],
            # t*p: during the pooling pass (p=0) the output block index stays
            # fixed, so no per-tile garbage writebacks; pass 1 writes each tile.
            out_specs=pl.BlockSpec((1, Cout, TS), lambda b, p, t: (b, 0, t * p)),
            scratch_shapes=[
                pltpu.VMEM((1, C), jnp.float32),    # running pooled sum
                pltpu.VMEM((Cout, C), x.dtype),     # gate-folded weight (MXU dtype)
            ],
        ),
        compiler_params=pltpu.CompilerParams(
            # batch shards across v7x's 2 TensorCores; pass/tile are sequential.
            dimension_semantics=("parallel", "arbitrary", "arbitrary")),
    )(x_p, w1t_f, b1_f, w2t_f, b2_f, wpw_f, bpw_f)

    return out.reshape(B, Cout, H, W)


def se_pointwise_ref(x, w1, b1, w2, b2, w_pw,
                     bn_gamma, bn_beta, bn_mean, bn_var, bn_eps=1e-3):
    """Pure-JAX mirror of SEblock -> Conv2d(1x1, bias=False) -> BatchNorm2d(eval)."""
    hp = jax.lax.Precision.HIGHEST
    xf = x.astype(jnp.float32)
    pooled = xf.mean(axis=(2, 3))                                       # (B, C)
    h = jnp.maximum(jnp.dot(pooled, w1.T, precision=hp) + b1, 0.0)      # (B, mid)
    z = jnp.dot(h, w2.T, precision=hp) + b2                             # (B, C)
    g = jnp.clip(z / 6.0 + 0.5, 0.0, 1.0)                               # Hardsigmoid
    y = xf * g[:, :, None, None]                                        # SEblock out
    pw = jnp.einsum('oc,bchw->bohw', w_pw, y, precision=hp)             # 1x1 conv
    inv = bn_gamma / jnp.sqrt(bn_var + bn_eps)
    return (pw - bn_mean[None, :, None, None]) * inv[None, :, None, None] \
        + bn_beta[None, :, None, None]


if __name__ == "__main__":
    # Shapes from Mobile_Water_Net.conv1 (n_feats=32, scale_factor=4): inside
    # DSConv the SE block sees C = 32*4 = 128 channels, mid = 64, and the
    # following 1x1 ConBNAct maps to Cout = 128 — here on a small 16x16 map.
    B, C, H, W = 2, 128, 16, 16
    mid, Cout = C // 2, 128

    key = jax.random.PRNGKey(0)
    ks = jax.random.split(key, 10)
    x = jax.random.normal(ks[0], (B, C, H, W), jnp.float32)
    w1 = jax.random.normal(ks[1], (mid, C), jnp.float32) * 0.1
    b1 = jax.random.normal(ks[2], (mid,), jnp.float32) * 0.1
    w2 = jax.random.normal(ks[3], (C, mid), jnp.float32) * 0.1
    b2 = jax.random.normal(ks[4], (C,), jnp.float32) * 0.1
    w_pw = jax.random.normal(ks[5], (Cout, C), jnp.float32) * 0.1
    bn_gamma = 1.0 + 0.1 * jax.random.normal(ks[6], (Cout,), jnp.float32)
    bn_beta = 0.1 * jax.random.normal(ks[7], (Cout,), jnp.float32)
    bn_mean = 0.1 * jax.random.normal(ks[8], (Cout,), jnp.float32)
    bn_var = jax.random.uniform(ks[9], (Cout,), jnp.float32,
                                minval=0.5, maxval=1.5)

    ref = se_pointwise_ref(x, w1, b1, w2, b2, w_pw,
                           bn_gamma, bn_beta, bn_mean, bn_var)

    # f32 activation I/O, forced small spatial tile (128) so the demo
    # exercises the multi-tile pooled-sum accumulation + pipelined pass 1.
    out = se_pointwise_block(x, w1, b1, w2, b2, w_pw,
                             bn_gamma, bn_beta, bn_mean, bn_var,
                             max_spatial_tile=128)
    out = jax.block_until_ready(out)
    np.testing.assert_allclose(np.asarray(out), np.asarray(ref),
                               rtol=5e-4, atol=5e-4)

    # bf16 activation I/O (recommended: op is HBM-bound on every generation);
    # default tiling.  Pooling and all matmuls still accumulate in f32.
    out_bf16 = se_pointwise_block(x.astype(jnp.bfloat16), w1, b1, w2, b2, w_pw,
                                  bn_gamma, bn_beta, bn_mean, bn_var)
    out_bf16 = jax.block_until_ready(out_bf16)
    np.testing.assert_allclose(np.asarray(out_bf16.astype(jnp.float32)),
                               np.asarray(ref), rtol=5e-2, atol=5e-2)

    print("KERNEL_OK")
</pallas_src>

<mosaic_0001>
module attributes {stable_mosaic.version = 11 : i64} {
  func.func @_se_pw_kernel(%arg0: i32, %arg1: i32, %arg2: i32, %arg3: memref<1x128x128xf32, #tpu.memory_space<vmem>>, %arg4: memref<128x64xf32, #tpu.memory_space<vmem>>, %arg5: memref<1x64xf32, #tpu.memory_space<vmem>>, %arg6: memref<64x128xf32, #tpu.memory_space<vmem>>, %arg7: memref<1x128xf32, #tpu.memory_space<vmem>>, %arg8: memref<128x128xf32, #tpu.memory_space<vmem>>, %arg9: memref<128x1xf32, #tpu.memory_space<vmem>>, %arg10: memref<1x128x128xf32, #tpu.memory_space<vmem>>, %arg11: memref<1x128xf32, #tpu.memory_space<vmem>>, %arg12: memref<128x128xf32, #tpu.memory_space<vmem>>) attributes {dimension_semantics = [#tpu.dimension_semantics<parallel>, #tpu.dimension_semantics<arbitrary>, #tpu.dimension_semantics<arbitrary>], iteration_bounds = array<i64: 2, 2, 2>, scalar_prefetch = 0 : i64, scratch_operands = 2 : i64, tpu.core_type = #tpu.core_type<tc>, window_params = [{transform_indices = @transform_0, window_bounds = array<i64: 1, 128, 128>}, {pipeline_mode = #tpu.pipeline_mode<synchronous>, transform_indices = @transform_1, window_bounds = array<i64: 128, 64>}, {pipeline_mode = #tpu.pipeline_mode<synchronous>, transform_indices = @transform_2, window_bounds = array<i64: 1, 64>}, {pipeline_mode = #tpu.pipeline_mode<synchronous>, transform_indices = @transform_3, window_bounds = array<i64: 64, 128>}, {pipeline_mode = #tpu.pipeline_mode<synchronous>, transform_indices = @transform_4, window_bounds = array<i64: 1, 128>}, {pipeline_mode = #tpu.pipeline_mode<synchronous>, transform_indices = @transform_5, window_bounds = array<i64: 128, 128>}, {pipeline_mode = #tpu.pipeline_mode<synchronous>, transform_indices = @transform_6, window_bounds = array<i64: 128, 1>}, {transform_indices = @transform_7, window_bounds = array<i64: 1, 128, 128>}]} {
    %c0_i32 = arith.constant 0 : i32
    %0 = arith.cmpi eq, %arg1, %c0_i32 : i32
    %1 = arith.extui %0 : i1 to i32
    %c0_i32_0 = arith.constant 0 : i32
    %2 = arith.cmpi ne, %1, %c0_i32_0 : i32
    scf.if %2 {
      %c0_i32_2 = arith.constant 0 : i32
      %6 = arith.cmpi eq, %arg2, %c0_i32_2 : i32
      %7 = arith.extui %6 : i1 to i32
      %c0_i32_3 = arith.constant 0 : i32
      %8 = arith.cmpi ne, %7, %c0_i32_3 : i32
      scf.if %8 {
        %cst_12 = arith.constant 0.000000e+00 : f32
        %17 = vector.broadcast %cst_12 : f32 to vector<1x128xf32>
        %c0_13 = arith.constant 0 : index
        %c0_14 = arith.constant 0 : index
        %18 = vector.load %arg11[%c0_13, %c0_14] : memref<1x128xf32, #tpu.memory_space<vmem>>, vector<1x128xf32>
        tpu.vector_store %arg11[%c0_13, %c0_14], %17 {strides = array<i32>} : memref<1x128xf32, #tpu.memory_space<vmem>>, vector<1x128xf32>,
      } else {
      }
      %c0 = arith.constant 0 : index
      %c0_4 = arith.constant 0 : index
      %c0_5 = arith.constant 0 : index
      %9 = vector.load %arg3[%c0, %c0_4, %c0_5] : memref<1x128x128xf32, #tpu.memory_space<vmem>>, vector<1x128x128xf32>
      %c0_6 = arith.constant 0 : index
      %c0_7 = arith.constant 0 : index
      %10 = vector.load %arg11[%c0_6, %c0_7] : memref<1x128xf32, #tpu.memory_space<vmem>>, vector<1x128xf32>
      %cst = arith.constant dense<0.000000e+00> : vector<1x128xf32>
      %11 = vector.multi_reduction <add>, %9, %cst [2] : vector<1x128x128xf32> to vector<1x128xf32>
      %12 = arith.addf %10, %11 : vector<1x128xf32>
      %c0_8 = arith.constant 0 : index
      %c0_9 = arith.constant 0 : index
      %13 = vector.load %arg11[%c0_8, %c0_9] : memref<1x128xf32, #tpu.memory_space<vmem>>, vector<1x128xf32>
      tpu.vector_store %arg11[%c0_8, %c0_9], %12 {strides = array<i32>} : memref<1x128xf32, #tpu.memory_space<vmem>>, vector<1x128xf32>,
      %c1_i32_10 = arith.constant 1 : i32
      %14 = arith.cmpi eq, %arg2, %c1_i32_10 : i32
      %15 = arith.extui %14 : i1 to i32
      %c0_i32_11 = arith.constant 0 : i32
      %16 = arith.cmpi ne, %15, %c0_i32_11 : i32
      scf.if %16 {
        %c0_12 = arith.constant 0 : index
        %c0_13 = arith.constant 0 : index
        %17 = vector.load %arg11[%c0_12, %c0_13] : memref<1x128xf32, #tpu.memory_space<vmem>>, vector<1x128xf32>
        %c0_14 = arith.constant 0 : index
        %c0_15 = arith.constant 0 : index
        %18 = vector.load %arg4[%c0_14, %c0_15] : memref<128x64xf32, #tpu.memory_space<vmem>>, vector<128x64xf32>
        %cst_16 = arith.constant dense<0.000000e+00> : vector<1x64xf32>
        %19 = tpu.matmul %17, %18, %cst_16 {dimension_numbers = #tpu.dot_dimension_numbers<[1], [0], [0], [1], [0, 0, 1, 1], [], []>} : vector<1x128xf32>, vector<128x64xf32>, vector<1x64xf32> -> vector<1x64xf32>
        %c0_17 = arith.constant 0 : index
        %c0_18 = arith.constant 0 : index
        %20 = vector.load %arg5[%c0_17, %c0_18] : memref<1x64xf32, #tpu.memory_space<vmem>>, vector<1x64xf32>
        %21 = arith.addf %19, %20 : vector<1x64xf32>
        %cst_19 = arith.constant 0.000000e+00 : f32
        %22 = vector.broadcast %cst_19 : f32 to vector<1x64xf32>
        %23 = arith.maximumf %21, %22 : vector<1x64xf32>
        %c0_20 = arith.constant 0 : index
        %c0_21 = arith.constant 0 : index
        %24 = vector.load %arg6[%c0_20, %c0_21] : memref<64x128xf32, #tpu.memory_space<vmem>>, vector<64x128xf32>
        %cst_22 = arith.constant dense<0.000000e+00> : vector<1x128xf32>
        %25 = tpu.matmul %23, %24, %cst_22 {dimension_numbers = #tpu.dot_dimension_numbers<[1], [0], [0], [1], [0, 0, 1, 1], [], []>} : vector<1x64xf32>, vector<64x128xf32>, vector<1x128xf32> -> vector<1x128xf32>
        %c0_23 = arith.constant 0 : index
        %c0_24 = arith.constant 0 : index
        %26 = vector.load %arg7[%c0_23, %c0_24] : memref<1x128xf32, #tpu.memory_space<vmem>>, vector<1x128xf32>
        %27 = arith.addf %25, %26 : vector<1x128xf32>
        %cst_25 = arith.constant 0.000000e+00 : f32
        %cst_26 = arith.constant 1.000000e+00 : f32
        %28 = vector.broadcast %cst_25 : f32 to vector<1x128xf32>
        %29 = arith.maximumf %28, %27 : vector<1x128xf32>
        %30 = vector.broadcast %cst_26 : f32 to vector<1x128xf32>
        %31 = arith.minimumf %30, %29 : vector<1x128xf32>
        %c0_27 = arith.constant 0 : index
        %c0_28 = arith.constant 0 : index
        %32 = vector.load %arg8[%c0_27, %c0_28] : memref<128x128xf32, #tpu.memory_space<vmem>>, vector<128x128xf32>
        %33 = vector.broadcast %31 : vector<1x128xf32> to vector<128x128xf32>
        %34 = arith.mulf %32, %33 : vector<128x128xf32>
        %c0_29 = arith.constant 0 : index
        %c0_30 = arith.constant 0 : index
        %35 = vector.load %arg12[%c0_29, %c0_30] : memref<128x128xf32, #tpu.memory_space<vmem>>, vector<128x128xf32>
        tpu.vector_store %arg12[%c0_29, %c0_30], %34 {strides = array<i32>} : memref<128x128xf32, #tpu.memory_space<vmem>>, vector<128x128xf32>,
      } else {
      }
    } else {
    }
    %c1_i32 = arith.constant 1 : i32
    %3 = arith.cmpi eq, %arg1, %c1_i32 : i32
    %4 = arith.extui %3 : i1 to i32
    %c0_i32_1 = arith.constant 0 : i32
    %5 = arith.cmpi ne, %4, %c0_i32_1 : i32
    scf.if %5 {
      %c0 = arith.constant 0 : index
      %c0_2 = arith.constant 0 : index
      %c0_3 = arith.constant 0 : index
      %6 = vector.load %arg3[%c0, %c0_2, %c0_3] : memref<1x128x128xf32, #tpu.memory_space<vmem>>, vector<1x128x128xf32>
      %c0_4 = arith.constant 0 : index
      %c0_5 = arith.constant 0 : index
      %7 = vector.load %arg12[%c0_4, %c0_5] : memref<128x128xf32, #tpu.memory_space<vmem>>, vector<128x128xf32>
      %8 = vector.shape_cast %6 : vector<1x128x128xf32> to vector<128x128xf32>
      %cst = arith.constant dense<0.000000e+00> : vector<128x128xf32>
      %9 = tpu.matmul %7, %8, %cst {dimension_numbers = #tpu.dot_dimension_numbers<[1], [0], [0], [1], [0, 0, 1, 1], [], []>} : vector<128x128xf32>, vector<128x128xf32>, vector<128x128xf32> -> vector<128x128xf32>
      %c0_6 = arith.constant 0 : index
      %c0_7 = arith.constant 0 : index
      %10 = vector.load %arg9[%c0_6, %c0_7] : memref<128x1xf32, #tpu.memory_space<vmem>>, vector<128x1xf32>
      %11 = vector.broadcast %10 : vector<128x1xf32> to vector<128x128xf32>
      %12 = arith.addf %9, %11 : vector<128x128xf32>
      %c0_8 = arith.constant 0 : index
      %c0_9 = arith.constant 0 : index
      %c0_10 = arith.constant 0 : index
      %13 = vector.load %arg10[%c0_8, %c0_9, %c0_10] : memref<1x128x128xf32, #tpu.memory_space<vmem>>, vector<1x128x128xf32>
      %14 = vector.shape_cast %13 : vector<1x128x128xf32> to vector<128x128xf32>
      %15 = vector.shape_cast %12 : vector<128x128xf32> to vector<1x128x128xf32>
      tpu.vector_store %arg10[%c0_8, %c0_9, %c0_10], %15 {strides = array<i32>} : memref<1x128x128xf32, #tpu.memory_space<vmem>>, vector<1x128x128xf32>,
    } else {
    }
    return
  }
  func.func @transform_0(%arg0: i32, %arg1: i32, %arg2: i32) -> (i32, i32, i32) {
    %c0_i32 = arith.constant 0 : i32
    %c0_i32_0 = arith.constant 0 : i32
    return %arg0, %c0_i32, %arg2 : i32, i32, i32
  }
  func.func @transform_1(%arg0: i32, %arg1: i32, %arg2: i32) -> (i32, i32) {
    %c0_i32 = arith.constant 0 : i32
    %c0_i32_0 = arith.constant 0 : i32
    %c0_i32_1 = arith.constant 0 : i32
    return %c0_i32, %c0_i32_0 : i32, i32
  }
  func.func @transform_2(%arg0: i32, %arg1: i32, %arg2: i32) -> (i32, i32) {
    %c0_i32 = arith.constant 0 : i32
    %c0_i32_0 = arith.constant 0 : i32
    %c0_i32_1 = arith.constant 0 : i32
    return %c0_i32, %c0_i32_0 : i32, i32
  }
  func.func @transform_3(%arg0: i32, %arg1: i32, %arg2: i32) -> (i32, i32) {
    %c0_i32 = arith.constant 0 : i32
    %c0_i32_0 = arith.constant 0 : i32
    %c0_i32_1 = arith.constant 0 : i32
    return %c0_i32, %c0_i32_0 : i32, i32
  }
  func.func @transform_4(%arg0: i32, %arg1: i32, %arg2: i32) -> (i32, i32) {
    %c0_i32 = arith.constant 0 : i32
    %c0_i32_0 = arith.constant 0 : i32
    %c0_i32_1 = arith.constant 0 : i32
    return %c0_i32, %c0_i32_0 : i32, i32
  }
  func.func @transform_5(%arg0: i32, %arg1: i32, %arg2: i32) -> (i32, i32) {
    %c0_i32 = arith.constant 0 : i32
    %c0_i32_0 = arith.constant 0 : i32
    %c0_i32_1 = arith.constant 0 : i32
    return %c0_i32, %c0_i32_0 : i32, i32
  }
  func.func @transform_6(%arg0: i32, %arg1: i32, %arg2: i32) -> (i32, i32) {
    %c0_i32 = arith.constant 0 : i32
    %c0_i32_0 = arith.constant 0 : i32
    %c0_i32_1 = arith.constant 0 : i32
    return %c0_i32, %c0_i32_0 : i32, i32
  }
  func.func @transform_7(%arg0: i32, %arg1: i32, %arg2: i32) -> (i32, i32, i32) {
    %0 = arith.muli %arg2, %arg1 : i32
    %c0_i32 = arith.constant 0 : i32
    %c0_i32_0 = arith.constant 0 : i32
    return %arg0, %c0_i32, %0 : i32, i32, i32
  }
}

</mosaic_0001>

<llo_original>
// kernel: tpu_custom_call.1
$region0: #{tpu_custom_call.1}
  #allocation0 [shape = 'u32[]', space=smem, size = 0x4, offset = 0x4, fixed_abs, tag = 'smem constant byte address 0x4 - core index']
  #allocation1 [shape = 'u32[144,128]{1,0:T(1,128)}', space=vmem, size = 0x12000, scoped, tag = 'internal scratch']
  #allocation2 [shape = 'f32[1,128]{1,0:T(1,128)}', space=vmem, size = 0x200, scoped, tag = 'scratch operand']
  #allocation3 [shape = 'f32[128,128]{1,0:T(8,128)}', space=vmem, size = 0x10000, scoped, tag = 'scratch operand']
  %s0 = inlined_call_operand.hbm [shape: f32[2,128,256], index: 0, kind: input, shape index: {}]
  %s1 = inlined_call_operand.vmem [shape: f32[128,64], index: 1, kind: input, shape index: {}]
  %s2 = inlined_call_operand.vmem [shape: f32[1,64], index: 2, kind: input, shape index: {}]
  %s3 = inlined_call_operand.vmem [shape: f32[64,128], index: 3, kind: input, shape index: {}]
  %s4 = inlined_call_operand.vmem [shape: f32[1,128], index: 4, kind: input, shape index: {}]
  %s5 = inlined_call_operand.vmem [shape: f32[128,128], index: 5, kind: input, shape index: {}]
  %s6 = inlined_call_operand.vmem [shape: f32[128,1], index: 6, kind: input, shape index: {}]
  %s7 = inlined_call_operand.hbm [shape: f32[2,128,256], index: 7, kind: output, shape index: {}]
  %s8 = sld [smem:[#allocation0]]
  $region81: #{tpu_custom_call.1} parent=0
    _
  %s10 = ssub.s32 1, %s8
  %s11 = scalar_select 0, %s10, %s8
  $region1: #{tpu_custom_call.1} parent=0
    #allocation4 [shape = 'u8[131072]{0}', space=vmem, size = 0x20000, scoped, tag = 'input window, operand 0']
    #allocation5 [shape = 's32[2]{0}', space=sflag, size = 0x8, scoped, tag = 'scoped memory for tpu_custom_call.1']
    #allocation6 [shape = 's32[2]{0}', space=sflag, size = 0x8, scoped, tag = 'scoped memory for tpu_custom_call.1']
    #allocation7 [shape = 'u8[131072]{0}', space=vmem, size = 0x20000, scoped, tag = 'output window, operand 0']
    %12 = vsyncpa [#allocation5], 0
    %s13 = scalar_lea.sflag [#allocation5], 1
    %14 = vsyncpa %s13, 0
    %15 = vsyncpa [#allocation6], 0
    %s16 = scalar_lea.sflag [#allocation6], 1
    %17 = vsyncpa %s16, 0
    loop: start=0, step=1, limit=10
    $region2: #{tpu_custom_call.1} parent=1 // loop_pre_header
      _
    $region3: #{tpu_custom_call.1} parent=1 // loop_header
      %s19 = sphi 0, %s23
      %p20 = scmp.ge.s32.totalorder %s19, 10
      %s26 = sphi 0, %s45
      %s27 = sphi 0, %s41
      %s28 = sphi 0, %s37
      %s29 = sphi 0, %s26
      %s30 = sphi 0, %s27
      %s31 = sphi 0, %s28
      %s32 = sphi 0, %s29
      %s33 = sphi 0, %s30
      %s34 = sphi 0, %s31
      %s50 = sphi 0, %s52
      %s53 = sphi 0, %s50
      %s54 = sphi 0, %s53
      %s70 = sphi 0, %s54
      %s74 = sphi 0, %s74
      %s76 = sphi 0, %s74
      %s77 = sphi 0, %s76
      %s91 = sphi 0, %s77
      %s95 = sphi 0, %s95
      %s97 = sphi 0, %s95
      %s98 = sphi 0, %s97
      %s112 = sphi 0, %s98
      %s116 = sphi 0, %s116
      %s118 = sphi 0, %s116
      %s119 = sphi 0, %s118
      %s133 = sphi 0, %s119
      %s137 = sphi 0, %s137
      %s139 = sphi 0, %s137
      %s140 = sphi 0, %s139
      %s154 = sphi 0, %s140
      %s158 = sphi 0, %s158
      %s160 = sphi 0, %s158
      %s161 = sphi 0, %s160
      %s175 = sphi 0, %s161
      %s179 = sphi 0, %s179
      %s181 = sphi 0, %s179
      %s182 = sphi 0, %s181
      %s196 = sphi 0, %s182
      %s206 = sphi 0, %s208
      %s209 = sphi 0, %s206
      %s210 = sphi 0, %s209
      %s226 = sphi 0, %s210
    $region4: #{tpu_custom_call.1} parent=1 // loop_header_branch
      %22 = sbr.rel (%p20) target = $region8
    $region5: #{tpu_custom_call.1} parent=1 // loop_body
      %s24 = ssub.s32 %s19, 1
      %s25 = ssub.s32 %s19, 2
      %s35 = sadd.s32 1, %s28
      %p36 = scmp.ge.s32.totalorder %s35, 2
      %s37 = scalar_select %p36, 0, %s35
      %s38 = sadd.s32 1, %s27
      %s39 = scalar_select %p36, %s38, %s27
      %p40 = scmp.ge.s32.totalorder %s39, 2
      %s41 = scalar_select %p40, 0, %s39
      %s42 = sadd.s32 1, %s26
      %s43 = scalar_select %p40, %s42, %s26
      %p44 = scmp.ge.s32.totalorder %s43, 2
      %s45 = scalar_select %p44, 0, %s43
      %s46 = ssub.s32 %s26, %s45
      %s47 = ssub.s32 %s28, %s37
      %s48 = sor.u32 %s46, %s47
      %p49 = scmp.eq.s32.totalorder %s48, 0
      %s51 = sadd.s32 %s50, 1
      %s52 = scalar_select %p49, %s50, %s51
      %p55 = pneg %p49
      %p56 = scmp.eq.s32.totalorder %s19, 7
      %p57 = por %p55, %p56
      %p58 = scmp.ne.s32.totalorder %s50, %s53
      %p59 = scmp.eq.s32.totalorder %s19, 0
      %p60 = por %p58, %p59
      %p61 = scmp.ne.s32.totalorder %s50, %s53
      %p62 = scmp.eq.s32.totalorder %s24, 7
      %p63 = por %p61, %p62
      %p64 = scmp.ne.s32.totalorder %s53, %s54
      %p65 = scmp.eq.s32.totalorder %s24, 0
      %p66 = por %p64, %p65
      %p67 = scmp.ne.s32.totalorder %s53, %s54
      %p68 = scmp.eq.s32.totalorder %s25, 7
      %p69 = por %p67, %p68
      %p71 = scmp.ne.s32.totalorder %s54, %s70
      %p72 = scmp.eq.s32.totalorder %s25, 0
      %p73 = por %p71, %p72
      %s75 = sadd.s32 %s74, 1
      %p78 = scmp.eq.s32.totalorder %s19, 7
      %p79 = scmp.ne.s32.totalorder %s74, %s76
      %p80 = scmp.eq.s32.totalorder %s19, 0
      %p81 = por %p79, %p80
      %p82 = scmp.ne.s32.totalorder %s74, %s76
      %p83 = scmp.eq.s32.totalorder %s24, 7
      %p84 = por %p82, %p83
      %p85 = scmp.ne.s32.totalorder %s76, %s77
      %p86 = scmp.eq.s32.totalorder %s24, 0
      %p87 = por %p85, %p86
      %p88 = scmp.ne.s32.totalorder %s76, %s77
      %p89 = scmp.eq.s32.totalorder %s25, 7
      %p90 = por %p88, %p89
      %p92 = scmp.ne.s32.totalorder %s77, %s91
      %p93 = scmp.eq.s32.totalorder %s25, 0
      %p94 = por %p92, %p93
      %s96 = sadd.s32 %s95, 1
      %p99 = scmp.eq.s32.totalorder %s19, 7
      %p100 = scmp.ne.s32.totalorder %s95, %s97
      %p101 = scmp.eq.s32.totalorder %s19, 0
      %p102 = por %p100, %p101
      %p103 = scmp.ne.s32.totalorder %s95, %s97
      %p104 = scmp.eq.s32.totalorder %s24, 7
      %p105 = por %p103, %p104
      %p106 = scmp.ne.s32.totalorder %s97, %s98
      %p107 = scmp.eq.s32.totalorder %s24, 0
      %p108 = por %p106, %p107
      %p109 = scmp.ne.s32.totalorder %s97, %s98
      %p110 = scmp.eq.s32.totalorder %s25, 7
      %p111 = por %p109, %p110
      %p113 = scmp.ne.s32.totalorder %s98, %s112
      %p114 = scmp.eq.s32.totalorder %s25, 0
      %p115 = por %p113, %p114
      %s117 = sadd.s32 %s116, 1
      %p120 = scmp.eq.s32.totalorder %s19, 7
      %p121 = scmp.ne.s32.totalorder %s116, %s118
      %p122 = scmp.eq.s32.totalorder %s19, 0
      %p123 = por %p121, %p122
      %p124 = scmp.ne.s32.totalorder %s116, %s118
      %p125 = scmp.eq.s32.totalorder %s24, 7
      %p126 = por %p124, %p125
      %p127 = scmp.ne.s32.totalorder %s118, %s119
      %p128 = scmp.eq.s32.totalorder %s24, 0
      %p129 = por %p127, %p128
      %p130 = scmp.ne.s32.totalorder %s118, %s119
      %p131 = scmp.eq.s32.totalorder %s25, 7
      %p132 = por %p130, %p131
      %p134 = scmp.ne.s32.totalorder %s119, %s133
      %p135 = scmp.eq.s32.totalorder %s25, 0
      %p136 = por %p134, %p135
      %s138 = sadd.s32 %s137, 1
      %p141 = scmp.eq.s32.totalorder %s19, 7
      %p142 = scmp.ne.s32.totalorder %s137, %s139
      %p143 = scmp.eq.s32.totalorder %s19, 0
      %p144 = por %p142, %p143
      %p145 = scmp.ne.s32.totalorder %s137, %s139
      %p146 = scmp.eq.s32.totalorder %s24, 7
      %p147 = por %p145, %p146
      %p148 = scmp.ne.s32.totalorder %s139, %s140
      %p149 = scmp.eq.s32.totalorder %s24, 0
      %p150 = por %p148, %p149
      %p151 = scmp.ne.s32.totalorder %s139, %s140
      %p152 = scmp.eq.s32.totalorder %s25, 7
      %p153 = por %p151, %p152
      %p155 = scmp.ne.s32.totalorder %s140, %s154
      %p156 = scmp.eq.s32.totalorder %s25, 0
      %p157 = por %p155, %p156
      %s159 = sadd.s32 %s158, 1
      %p162 = scmp.eq.s32.totalorder %s19, 7
      %p163 = scmp.ne.s32.totalorder %s158, %s160
      %p164 = scmp.eq.s32.totalorder %s19, 0
      %p165 = por %p163, %p164
      %p166 = scmp.ne.s32.totalorder %s158, %s160
      %p167 = scmp.eq.s32.totalorder %s24, 7
      %p168 = por %p166, %p167
      %p169 = scmp.ne.s32.totalorder %s160, %s161
      %p170 = scmp.eq.s32.totalorder %s24, 0
      %p171 = por %p169, %p170
      %p172 = scmp.ne.s32.totalorder %s160, %s161
      %p173 = scmp.eq.s32.totalorder %s25, 7
      %p174 = por %p172, %p173
      %p176 = scmp.ne.s32.totalorder %s161, %s175
      %p177 = scmp.eq.s32.totalorder %s25, 0
      %p178 = por %p176, %p177
      %s180 = sadd.s32 %s179, 1
      %p183 = scmp.eq.s32.totalorder %s19, 7
      %p184 = scmp.ne.s32.totalorder %s179, %s181
      %p185 = scmp.eq.s32.totalorder %s19, 0
      %p186 = por %p184, %p185
      %p187 = scmp.ne.s32.totalorder %s179, %s181
      %p188 = scmp.eq.s32.totalorder %s24, 7
      %p189 = por %p187, %p188
      %p190 = scmp.ne.s32.totalorder %s181, %s182
      %p191 = scmp.eq.s32.totalorder %s24, 0
      %p192 = por %p190, %p191
      %p193 = scmp.ne.s32.totalorder %s181, %s182
      %p194 = scmp.eq.s32.totalorder %s25, 7
      %p195 = por %p193, %p194
      %p197 = scmp.ne.s32.totalorder %s182, %s196
      %p198 = scmp.eq.s32.totalorder %s25, 0
      %p199 = por %p197, %p198
      %s200 = smul.u32 %s28, %s27
      %s201 = smul.u32 %s37, %s41
      %s202 = ssub.s32 %s26, %s45
      %s203 = ssub.s32 %s200, %s201
      %s204 = sor.u32 %s202, %s203
      %p205 = scmp.eq.s32.totalorder %s204, 0
      %s207 = sadd.s32 %s206, 1
      %s208 = scalar_select %p205, %s206, %s207
      %p211 = pneg %p205
      %p212 = scmp.eq.s32.totalorder %s19, 7
      %p213 = por %p211, %p212
      %p214 = scmp.ne.s32.totalorder %s206, %s209
      %p215 = scmp.eq.s32.totalorder %s19, 0
      %p216 = por %p214, %p215
      %p217 = scmp.ne.s32.totalorder %s206, %s209
      %p218 = scmp.eq.s32.totalorder %s24, 7
      %p219 = por %p217, %p218
      %p220 = scmp.ne.s32.totalorder %s209, %s210
      %p221 = scmp.eq.s32.totalorder %s24, 0
      %p222 = por %p220, %p221
      %p223 = scmp.ne.s32.totalorder %s209, %s210
      %p224 = scmp.eq.s32.totalorder %s25, 7
      %p225 = por %p223, %p224
      %p227 = scmp.ne.s32.totalorder %s210, %s226
      %p228 = scmp.eq.s32.totalorder %s25, 0
      %p229 = por %p227, %p228
      %p230 = scmp.le.s32.totalorder 1, %s19
      %p231 = scmp.lt.s32.totalorder %s19, 9
      %p232 = pnand %p230, %p231
      %p233 = pneg %p232
      // Predicated region
      $region9: #{tpu_custom_call.1} parent=5 // pred_check
        _
      $region10: #{tpu_custom_call.1} parent=5 // pred_check_branch
        %235 = sbr.rel (%p232) target = $region12
      $region11: #{tpu_custom_call.1} parent=5 // pred_region
        %s236 = ssub.s32 %s19, 1
        // Predicated region
        $region13: #{tpu_custom_call.1} parent=11 // pred_check
          %p237 = pneg %p87
        $region14: #{tpu_custom_call.1} parent=11 // pred_check_branch
          %239 = sbr.rel (%p237) target = $region16
        $region15: #{tpu_custom_call.1} parent=11 // pred_region
          _
        $region16: #{tpu_custom_call.1} parent=11 // pred_fallthru
          _
        // Predicated region
        $region17: #{tpu_custom_call.1} parent=11 // pred_check
          %p240 = pneg %p108
        $region18: #{tpu_custom_call.1} parent=11 // pred_check_branch
          %242 = sbr.rel (%p240) target = $region20
        $region19: #{tpu_custom_call.1} parent=11 // pred_region
          _
        $region20: #{tpu_custom_call.1} parent=11 // pred_fallthru
          _
        // Predicated region
        $region21: #{tpu_custom_call.1} parent=11 // pred_check
          %p243 = pneg %p129
        $region22: #{tpu_custom_call.1} parent=11 // pred_check_branch
          %245 = sbr.rel (%p243) target = $region24
        $region23: #{tpu_custom_call.1} parent=11 // pred_region
          _
        $region24: #{tpu_custom_call.1} parent=11 // pred_fallthru
          _
        // Predicated region
        $region25: #{tpu_custom_call.1} parent=11 // pred_check
          %p246 = pneg %p150
        $region26: #{tpu_custom_call.1} parent=11 // pred_check_branch
          %248 = sbr.rel (%p246) target = $region28
        $region27: #{tpu_custom_call.1} parent=11 // pred_region
          _
        $region28: #{tpu_custom_call.1} parent=11 // pred_fallthru
          _
        // Predicated region
        $region29: #{tpu_custom_call.1} parent=11 // pred_check
          %p249 = pneg %p171
        $region30: #{tpu_custom_call.1} parent=11 // pred_check_branch
          %251 = sbr.rel (%p249) target = $region32
        $region31: #{tpu_custom_call.1} parent=11 // pred_region
          _
        $region32: #{tpu_custom_call.1} parent=11 // pred_fallthru
          _
        // Predicated region
        $region33: #{tpu_custom_call.1} parent=11 // pred_check
          %p252 = pneg %p192
        $region34: #{tpu_custom_call.1} parent=11 // pred_check_branch
          %254 = sbr.rel (%p252) target = $region36
        $region35: #{tpu_custom_call.1} parent=11 // pred_region
          _
        $region36: #{tpu_custom_call.1} parent=11 // pred_fallthru
          _
      $region12: #{tpu_custom_call.1} parent=5 // pred_fallthru
        _
      %p255 = scmp.lt.s32.totalorder %s19, 8
      // Predicated region
      $region37: #{tpu_custom_call.1} parent=5 // pred_check
        %p256 = pneg %p255
      $region38: #{tpu_custom_call.1} parent=5 // pred_check_branch
        %258 = sbr.rel (%p256) target = $region40
      $region39: #{tpu_custom_call.1} parent=5 // pred_region
        // Predicated region
        $region41: #{tpu_custom_call.1} parent=39 // pred_check
          %p259 = pneg %p60
        $region42: #{tpu_custom_call.1} parent=39 // pred_check_branch
          %261 = sbr.rel (%p259) target = $region44
        $region43: #{tpu_custom_call.1} parent=39 // pred_region
          %s262 = sand.u32 %s50, 1
          %s263 = scalar_lea.sflag [#allocation5], %s262
          %s264 = sand.u32 %s50, 1
          %s265 = smul.addr %s264, 128
          %s266 = scalar_lea.vmem [#allocation4], %s265
          %s268 = ssub.s32 2048, 2048
          %269 = vsyncadd %s263, %s268
          %s270 = smul.addr %s26, 32
          %s271 = sadd.s32 %s28, %s270
          %s272 = smul.addr %s271, 128
          %s273 = scalar_lea.hbm %s0, %s272
          %s274 = sshll.u32 %s266, 4
          %s275 = int_to_ptr.vmem [resolvable:$true] %s274
          %280 = dma.hbm_to_vmem [thread:$0]  %s273, 2048, %s275, %s263, 256, 128, 8
        $region44: #{tpu_custom_call.1} parent=39 // pred_fallthru
          _
      $region40: #{tpu_custom_call.1} parent=5 // pred_fallthru
        _
      %p281 = scmp.le.s32.totalorder 1, %s19
      %p282 = scmp.lt.s32.totalorder %s19, 9
      %p283 = pnand %p281, %p282
      %p284 = pneg %p283
      // Predicated region
      $region45: #{tpu_custom_call.1} parent=5 // pred_check
        _
      $region46: #{tpu_custom_call.1} parent=5 // pred_check_branch
        %286 = sbr.rel (%p283) target = $region48
      $region47: #{tpu_custom_call.1} parent=5 // pred_region
        %s287 = ssub.s32 %s19, 1
        %s288 = sand.u32 %s53, 1
        %s289 = scalar_lea.sflag [#allocation5], %s288
        %s290 = sand.u32 %s53, 1
        %s291 = smul.addr %s290, 128
        %s292 = scalar_lea.vmem [#allocation4], %s291
        // Predicated region
        $region49: #{tpu_custom_call.1} parent=47 // pred_check
          %p293 = pneg %p66
        $region50: #{tpu_custom_call.1} parent=47 // pred_check_branch
          %295 = sbr.rel (%p293) target = $region52
        $region51: #{tpu_custom_call.1} parent=47 // pred_region
          %296 = dma.done %s289, 2048
        $region52: #{tpu_custom_call.1} parent=47 // pred_fallthru
          _
        %s297 = sand.u32 %s53, 1
        %s298 = scalar_lea.sflag [#allocation5], %s297
        %s299 = sand.u32 %s53, 1
        %s300 = smul.addr %s299, 128
        %s301 = scalar_lea.vmem [#allocation4], %s300
        %p302 = pneg %p66
        %p303 = pneg %p63
        %p304 = pneg %p87
        %p305 = pneg %p84
        %p306 = pneg %p108
        %p307 = pneg %p105
        %p308 = pneg %p129
        %p309 = pneg %p126
        %p310 = pneg %p150
        %p311 = pneg %p147
        %p312 = pneg %p171
        %p313 = pneg %p168
        %p314 = pneg %p192
        %p315 = pneg %p189
        %p316 = pneg %p222
        %p317 = pneg %p219
        %s318 = sand.u32 %s209, 1
        %s319 = scalar_lea.sflag [#allocation6], %s318
        %s320 = sand.u32 %s209, 1
        %s321 = smul.addr %s320, 128
        %s322 = scalar_lea.vmem [#allocation7], %s321
        %s323 = smul.u32 %s31, %s30
        %p324 = scmp.eq.s32.totalorder %s30, 0
        // Predicated region
        $region53: #{tpu_custom_call.1} parent=47 // pred_check
          %p325 = pneg %p324
        $region54: #{tpu_custom_call.1} parent=47 // pred_check_branch
          %327 = sbr.rel (%p325) target = $region56
        $region55: #{tpu_custom_call.1} parent=47 // pred_region
          %p328 = scmp.eq.s32.totalorder %s31, 0
          // Predicated region
          $region57: #{tpu_custom_call.1} parent=55 // pred_check
            %p329 = pneg %p328
          $region58: #{tpu_custom_call.1} parent=55 // pred_check_branch
            %331 = sbr.rel (%p329) target = $region60
          $region59: #{tpu_custom_call.1} parent=55 // pred_region
            %332 = vst [vmem:[#allocation2] sm:$0x1] 0.0
          $region60: #{tpu_custom_call.1} parent=55 // pred_fallthru
            _
          %v333 = vld [vmem:[%s292] sm:$0xff]
          %v334 = vld [vmem:[%s292 + $0x8] sm:$0xff]
          %v335 = vld [vmem:[%s292 + $0x10] sm:$0xff]
          %v336 = vld [vmem:[%s292 + $0x18] sm:$0xff]
          %v337 = vld [vmem:[%s292 + $0x20] sm:$0xff]
          %v338 = vld [vmem:[%s292 + $0x28] sm:$0xff]
          %v339 = vld [vmem:[%s292 + $0x30] sm:$0xff]
          %v340 = vld [vmem:[%s292 + $0x38] sm:$0xff]
          %v341 = vld [vmem:[%s292 + $0x40] sm:$0xff]
          %v342 = vld [vmem:[%s292 + $0x48] sm:$0xff]
          %v343 = vld [vmem:[%s292 + $0x50] sm:$0xff]
          %v344 = vld [vmem:[%s292 + $0x58] sm:$0xff]
          %v345 = vld [vmem:[%s292 + $0x60] sm:$0xff]
          %v346 = vld [vmem:[%s292 + $0x68] sm:$0xff]
          %v347 = vld [vmem:[%s292 + $0x70] sm:$0xff]
          %v348 = vld [vmem:[%s292 + $0x78] sm:$0xff]
          %v349 = vld [vmem:[#allocation2] sm:$0x1]
          %350 = vadd.xlane.f32.xlu0 %v333
          %v351 = vpop.xlane.xlu0 %350
          %352 = vadd.xlane.f32.xlu0 %v334
          %v353 = vpop.xlane.xlu0 %352
          %354 = vadd.xlane.f32.xlu0 %v335
          %v355 = vpop.xlane.xlu0 %354
          %356 = vadd.xlane.f32.xlu0 %v336
          %v357 = vpop.xlane.xlu0 %356
          %358 = vadd.xlane.f32.xlu0 %v337
          %v359 = vpop.xlane.xlu0 %358
          %360 = vadd.xlane.f32.xlu0 %v338
          %v361 = vpop.xlane.xlu0 %360
          %362 = vadd.xlane.f32.xlu0 %v339
          %v363 = vpop.xlane.xlu0 %362
          %364 = vadd.xlane.f32.xlu0 %v340
          %v365 = vpop.xlane.xlu0 %364
          %366 = vadd.xlane.f32.xlu0 %v341
          %v367 = vpop.xlane.xlu0 %366
          %368 = vadd.xlane.f32.xlu0 %v342
          %v369 = vpop.xlane.xlu0 %368
          %370 = vadd.xlane.f32.xlu0 %v343
          %v371 = vpop.xlane.xlu0 %370
          %372 = vadd.xlane.f32.xlu0 %v344
          %v373 = vpop.xlane.xlu0 %372
          %374 = vadd.xlane.f32.xlu0 %v345
          %v375 = vpop.xlane.xlu0 %374
          %376 = vadd.xlane.f32.xlu0 %v346
          %v377 = vpop.xlane.xlu0 %376
          %378 = vadd.xlane.f32.xlu0 %v347
          %v379 = vpop.xlane.xlu0 %378
          %380 = vadd.xlane.f32.xlu0 %v348
          %v381 = vpop.xlane.xlu0 %380
          %v398 = vlaneseq
          %v399 = vshrl.u32 %v398, 7
          %v400 = vsub.s32 0, %v399
          %v401 = vrot.slane %v351, %v400
          %v402 = vlaneseq
          %v403 = vshrl.u32 %v402, 7
          %v404 = vsub.s32 1, %v403
          %v405 = vrot.slane %v351, %v404
          %v406 = vlaneseq
          %v407 = vshrl.u32 %v406, 7
          %v408 = vsub.s32 2, %v407
          %v409 = vrot.slane %v351, %v408
          %v410 = vlaneseq
          %v411 = vshrl.u32 %v410, 7
          %v412 = vsub.s32 3, %v411
          %v413 = vrot.slane %v351, %v412
          %v414 = vlaneseq
          %v415 = vshrl.u32 %v414, 7
          %v416 = vsub.s32 4, %v415
          %v417 = vrot.slane %v351, %v416
          %v418 = vlaneseq
          %v419 = vshrl.u32 %v418, 7
          %v420 = vsub.s32 5, %v419
          %v421 = vrot.slane %v351, %v420
          %v422 = vlaneseq
          %v423 = vshrl.u32 %v422, 7
          %v424 = vsub.s32 6, %v423
          %v425 = vrot.slane %v351, %v424
          %v426 = vlaneseq
          %v427 = vshrl.u32 %v426, 7
          %v428 = vsub.s32 7, %v427
          %v429 = vrot.slane %v351, %v428
          %v430 = vlaneseq
          %v431 = vshrl.u32 %v430, 7
          %v432 = vsub.s32 0, %v431
          %v433 = vrot.slane %v353, %v432
          %v434 = vlaneseq
          %v435 = vshrl.u32 %v434, 7
          %v436 = vsub.s32 1, %v435
          %v437 = vrot.slane %v353, %v436
          %v438 = vlaneseq
          %v439 = vshrl.u32 %v438, 7
          %v440 = vsub.s32 2, %v439
          %v441 = vrot.slane %v353, %v440
          %v442 = vlaneseq
          %v443 = vshrl.u32 %v442, 7
          %v444 = vsub.s32 3, %v443
          %v445 = vrot.slane %v353, %v444
          %v446 = vlaneseq
          %v447 = vshrl.u32 %v446, 7
          %v448 = vsub.s32 4, %v447
          %v449 = vrot.slane %v353, %v448
          %v450 = vlaneseq
          %v451 = vshrl.u32 %v450, 7
          %v452 = vsub.s32 5, %v451
          %v453 = vrot.slane %v353, %v452
          %v454 = vlaneseq
          %v455 = vshrl.u32 %v454, 7
          %v456 = vsub.s32 6, %v455
          %v457 = vrot.slane %v353, %v456
          %v458 = vlaneseq
          %v459 = vshrl.u32 %v458, 7
          %v460 = vsub.s32 7, %v459
          %v461 = vrot.slane %v353, %v460
          %v462 = vlaneseq
          %v463 = vshrl.u32 %v462, 7
          %v464 = vsub.s32 0, %v463
          %v465 = vrot.slane %v355, %v464
          %v466 = vlaneseq
          %v467 = vshrl.u32 %v466, 7
          %v468 = vsub.s32 1, %v467
          %v469 = vrot.slane %v355, %v468
          %v470 = vlaneseq
          %v471 = vshrl.u32 %v470, 7
          %v472 = vsub.s32 2, %v471
          %v473 = vrot.slane %v355, %v472
          %v474 = vlaneseq
          %v475 = vshrl.u32 %v474, 7
          %v476 = vsub.s32 3, %v475
          %v477 = vrot.slane %v355, %v476
          %v478 = vlaneseq
          %v479 = vshrl.u32 %v478, 7
          %v480 = vsub.s32 4, %v479
          %v481 = vrot.slane %v355, %v480
          %v482 = vlaneseq
          %v483 = vshrl.u32 %v482, 7
          %v484 = vsub.s32 5, %v483
          %v485 = vrot.slane %v355, %v484
          %v486 = vlaneseq
          %v487 = vshrl.u32 %v486, 7
          %v488 = vsub.s32 6, %v487
          %v489 = vrot.slane %v355, %v488
          %v490 = vlaneseq
          %v491 = vshrl.u32 %v490, 7
          %v492 = vsub.s32 7, %v491
          %v493 = vrot.slane %v355, %v492
          %v494 = vlaneseq
          %v495 = vshrl.u32 %v494, 7
          %v496 = vsub.s32 0, %v495
          %v497 = vrot.slane %v357, %v496
          %v498 = vlaneseq
          %v499 = vshrl.u32 %v498, 7
          %v500 = vsub.s32 1, %v499
          %v501 = vrot.slane %v357, %v500
          %v502 = vlaneseq
          %v503 = vshrl.u32 %v502, 7
          %v504 = vsub.s32 2, %v503
          %v505 = vrot.slane %v357, %v504
          %v506 = vlaneseq
          %v507 = vshrl.u32 %v506, 7
          %v508 = vsub.s32 3, %v507
          %v509 = vrot.slane %v357, %v508
          %v510 = vlaneseq
          %v511 = vshrl.u32 %v510, 7
          %v512 = vsub.s32 4, %v511
          %v513 = vrot.slane %v357, %v512
          %v514 = vlaneseq
          %v515 = vshrl.u32 %v514, 7
          %v516 = vsub.s32 5, %v515
          %v517 = vrot.slane %v357, %v516
          %v518 = vlaneseq
          %v519 = vshrl.u32 %v518, 7
          %v520 = vsub.s32 6, %v519
          %v521 = vrot.slane %v357, %v520
          %v522 = vlaneseq
          %v523 = vshrl.u32 %v522, 7
          %v524 = vsub.s32 7, %v523
          %v525 = vrot.slane %v357, %v524
          %v526 = vlaneseq
          %v527 = vshrl.u32 %v526, 7
          %v528 = vsub.s32 0, %v527
          %v529 = vrot.slane %v359, %v528
          %v530 = vlaneseq
          %v531 = vshrl.u32 %v530, 7
          %v532 = vsub.s32 1, %v531
          %v533 = vrot.slane %v359, %v532
          %v534 = vlaneseq
          %v535 = vshrl.u32 %v534, 7
          %v536 = vsub.s32 2, %v535
          %v537 = vrot.slane %v359, %v536
          %v538 = vlaneseq
          %v539 = vshrl.u32 %v538, 7
          %v540 = vsub.s32 3, %v539
          %v541 = vrot.slane %v359, %v540
          %v542 = vlaneseq
          %v543 = vshrl.u32 %v542, 7
          %v544 = vsub.s32 4, %v543
          %v545 = vrot.slane %v359, %v544
          %v546 = vlaneseq
          %v547 = vshrl.u32 %v546, 7
          %v548 = vsub.s32 5, %v547
          %v549 = vrot.slane %v359, %v548
          %v550 = vlaneseq
          %v551 = vshrl.u32 %v550, 7
          %v552 = vsub.s32 6, %v551
          %v553 = vrot.slane %v359, %v552
          %v554 = vlaneseq
          %v555 = vshrl.u32 %v554, 7
          %v556 = vsub.s32 7, %v555
          %v557 = vrot.slane %v359, %v556
          %v558 = vlaneseq
          %v559 = vshrl.u32 %v558, 7
          %v560 = vsub.s32 0, %v559
          %v561 = vrot.slane %v361, %v560
          %v562 = vlaneseq
          %v563 = vshrl.u32 %v562, 7
          %v564 = vsub.s32 1, %v563
          %v565 = vrot.slane %v361, %v564
          %v566 = vlaneseq
          %v567 = vshrl.u32 %v566, 7
          %v568 = vsub.s32 2, %v567
          %v569 = vrot.slane %v361, %v568
          %v570 = vlaneseq
          %v571 = vshrl.u32 %v570, 7
          %v572 = vsub.s32 3, %v571
          %v573 = vrot.slane %v361, %v572
          %v574 = vlaneseq
          %v575 = vshrl.u32 %v574, 7
          %v576 = vsub.s32 4, %v575
          %v577 = vrot.slane %v361, %v576
          %v578 = vlaneseq
          %v579 = vshrl.u32 %v578, 7
          %v580 = vsub.s32 5, %v579
          %v581 = vrot.slane %v361, %v580
          %v582 = vlaneseq
          %v583 = vshrl.u32 %v582, 7
          %v584 = vsub.s32 6, %v583
          %v585 = vrot.slane %v361, %v584
          %v586 = vlaneseq
          %v587 = vshrl.u32 %v586, 7
          %v588 = vsub.s32 7, %v587
          %v589 = vrot.slane %v361, %v588
          %v590 = vlaneseq
          %v591 = vshrl.u32 %v590, 7
          %v592 = vsub.s32 0, %v591
          %v593 = vrot.slane %v363, %v592
          %v594 = vlaneseq
          %v595 = vshrl.u32 %v594, 7
          %v596 = vsub.s32 1, %v595
          %v597 = vrot.slane %v363, %v596
          %v598 = vlaneseq
          %v599 = vshrl.u32 %v598, 7
          %v600 = vsub.s32 2, %v599
          %v601 = vrot.slane %v363, %v600
          %v602 = vlaneseq
          %v603 = vshrl.u32 %v602, 7
          %v604 = vsub.s32 3, %v603
          %v605 = vrot.slane %v363, %v604
          %v606 = vlaneseq
          %v607 = vshrl.u32 %v606, 7
          %v608 = vsub.s32 4, %v607
          %v609 = vrot.slane %v363, %v608
          %v610 = vlaneseq
          %v611 = vshrl.u32 %v610, 7
          %v612 = vsub.s32 5, %v611
          %v613 = vrot.slane %v363, %v612
          %v614 = vlaneseq
          %v615 = vshrl.u32 %v614, 7
          %v616 = vsub.s32 6, %v615
          %v617 = vrot.slane %v363, %v616
          %v618 = vlaneseq
          %v619 = vshrl.u32 %v618, 7
          %v620 = vsub.s32 7, %v619
          %v621 = vrot.slane %v363, %v620
          %v622 = vlaneseq
          %v623 = vshrl.u32 %v622, 7
          %v624 = vsub.s32 0, %v623
          %v625 = vrot.slane %v365, %v624
          %v626 = vlaneseq
          %v627 = vshrl.u32 %v626, 7
          %v628 = vsub.s32 1, %v627
          %v629 = vrot.slane %v365, %v628
          %v630 = vlaneseq
          %v631 = vshrl.u32 %v630, 7
          %v632 = vsub.s32 2, %v631
          %v633 = vrot.slane %v365, %v632
          %v634 = vlaneseq
          %v635 = vshrl.u32 %v634, 7
          %v636 = vsub.s32 3, %v635
          %v637 = vrot.slane %v365, %v636
          %v638 = vlaneseq
          %v639 = vshrl.u32 %v638, 7
          %v640 = vsub.s32 4, %v639
          %v641 = vrot.slane %v365, %v640
          %v642 = vlaneseq
          %v643 = vshrl.u32 %v642, 7
          %v644 = vsub.s32 5, %v643
          %v645 = vrot.slane %v365, %v644
          %v646 = vlaneseq
          %v647 = vshrl.u32 %v646, 7
          %v648 = vsub.s32 6, %v647
          %v649 = vrot.slane %v365, %v648
          %v650 = vlaneseq
          %v651 = vshrl.u32 %v650, 7
          %v652 = vsub.s32 7, %v651
          %v653 = vrot.slane %v365, %v652
          %v654 = vlaneseq
          %v655 = vshrl.u32 %v654, 7
          %v656 = vsub.s32 0, %v655
          %v657 = vrot.slane %v367, %v656
          %v658 = vlaneseq
          %v659 = vshrl.u32 %v658, 7
          %v660 = vsub.s32 1, %v659
          %v661 = vrot.slane %v367, %v660
          %v662 = vlaneseq
          %v663 = vshrl.u32 %v662, 7
          %v664 = vsub.s32 2, %v663
          %v665 = vrot.slane %v367, %v664
          %v666 = vlaneseq
          %v667 = vshrl.u32 %v666, 7
          %v668 = vsub.s32 3, %v667
          %v669 = vrot.slane %v367, %v668
          %v670 = vlaneseq
          %v671 = vshrl.u32 %v670, 7
          %v672 = vsub.s32 4, %v671
          %v673 = vrot.slane %v367, %v672
          %v674 = vlaneseq
          %v675 = vshrl.u32 %v674, 7
          %v676 = vsub.s32 5, %v675
          %v677 = vrot.slane %v367, %v676
          %v678 = vlaneseq
          %v679 = vshrl.u32 %v678, 7
          %v680 = vsub.s32 6, %v679
          %v681 = vrot.slane %v367, %v680
          %v682 = vlaneseq
          %v683 = vshrl.u32 %v682, 7
          %v684 = vsub.s32 7, %v683
          %v685 = vrot.slane %v367, %v684
          %v686 = vlaneseq
          %v687 = vshrl.u32 %v686, 7
          %v688 = vsub.s32 0, %v687
          %v689 = vrot.slane %v369, %v688
          %v690 = vlaneseq
          %v691 = vshrl.u32 %v690, 7
          %v692 = vsub.s32 1, %v691
          %v693 = vrot.slane %v369, %v692
          %v694 = vlaneseq
          %v695 = vshrl.u32 %v694, 7
          %v696 = vsub.s32 2, %v695
          %v697 = vrot.slane %v369, %v696
          %v698 = vlaneseq
          %v699 = vshrl.u32 %v698, 7
          %v700 = vsub.s32 3, %v699
          %v701 = vrot.slane %v369, %v700
          %v702 = vlaneseq
          %v703 = vshrl.u32 %v702, 7
          %v704 = vsub.s32 4, %v703
          %v705 = vrot.slane %v369, %v704
          %v706 = vlaneseq
          %v707 = vshrl.u32 %v706, 7
          %v708 = vsub.s32 5, %v707
          %v709 = vrot.slane %v369, %v708
          %v710 = vlaneseq
          %v711 = vshrl.u32 %v710, 7
          %v712 = vsub.s32 6, %v711
          %v713 = vrot.slane %v369, %v712
          %v714 = vlaneseq
          %v715 = vshrl.u32 %v714, 7
          %v716 = vsub.s32 7, %v715
          %v717 = vrot.slane %v369, %v716
          %v718 = vlaneseq
          %v719 = vshrl.u32 %v718, 7
          %v720 = vsub.s32 0, %v719
          %v721 = vrot.slane %v371, %v720
          %v722 = vlaneseq
          %v723 = vshrl.u32 %v722, 7
          %v724 = vsub.s32 1, %v723
          %v725 = vrot.slane %v371, %v724
          %v726 = vlaneseq
          %v727 = vshrl.u32 %v726, 7
          %v728 = vsub.s32 2, %v727
          %v729 = vrot.slane %v371, %v728
          %v730 = vlaneseq
          %v731 = vshrl.u32 %v730, 7
          %v732 = vsub.s32 3, %v731
          %v733 = vrot.slane %v371, %v732
          %v734 = vlaneseq
          %v735 = vshrl.u32 %v734, 7
          %v736 = vsub.s32 4, %v735
          %v737 = vrot.slane %v371, %v736
          %v738 = vlaneseq
          %v739 = vshrl.u32 %v738, 7
          %v740 = vsub.s32 5, %v739
          %v741 = vrot.slane %v371, %v740
          %v742 = vlaneseq
          %v743 = vshrl.u32 %v742, 7
          %v744 = vsub.s32 6, %v743
          %v745 = vrot.slane %v371, %v744
          %v746 = vlaneseq
          %v747 = vshrl.u32 %v746, 7
          %v748 = vsub.s32 7, %v747
          %v749 = vrot.slane %v371, %v748
          %v750 = vlaneseq
          %v751 = vshrl.u32 %v750, 7
          %v752 = vsub.s32 0, %v751
          %v753 = vrot.slane %v373, %v752
          %v754 = vlaneseq
          %v755 = vshrl.u32 %v754, 7
          %v756 = vsub.s32 1, %v755
          %v757 = vrot.slane %v373, %v756
          %v758 = vlaneseq
          %v759 = vshrl.u32 %v758, 7
          %v760 = vsub.s32 2, %v759
          %v761 = vrot.slane %v373, %v760
          %v762 = vlaneseq
          %v763 = vshrl.u32 %v762, 7
          %v764 = vsub.s32 3, %v763
          %v765 = vrot.slane %v373, %v764
          %v766 = vlaneseq
          %v767 = vshrl.u32 %v766, 7
          %v768 = vsub.s32 4, %v767
          %v769 = vrot.slane %v373, %v768
          %v770 = vlaneseq
          %v771 = vshrl.u32 %v770, 7
          %v772 = vsub.s32 5, %v771
          %v773 = vrot.slane %v373, %v772
          %v774 = vlaneseq
          %v775 = vshrl.u32 %v774, 7
          %v776 = vsub.s32 6, %v775
          %v777 = vrot.slane %v373, %v776
          %v778 = vlaneseq
          %v779 = vshrl.u32 %v778, 7
          %v780 = vsub.s32 7, %v779
          %v781 = vrot.slane %v373, %v780
          %v782 = vlaneseq
          %v783 = vshrl.u32 %v782, 7
          %v784 = vsub.s32 0, %v783
          %v785 = vrot.slane %v375, %v784
          %v786 = vlaneseq
          %v787 = vshrl.u32 %v786, 7
          %v788 = vsub.s32 1, %v787
          %v789 = vrot.slane %v375, %v788
          %v790 = vlaneseq
          %v791 = vshrl.u32 %v790, 7
          %v792 = vsub.s32 2, %v791
          %v793 = vrot.slane %v375, %v792
          %v794 = vlaneseq
          %v795 = vshrl.u32 %v794, 7
          %v796 = vsub.s32 3, %v795
          %v797 = vrot.slane %v375, %v796
          %v798 = vlaneseq
          %v799 = vshrl.u32 %v798, 7
          %v800 = vsub.s32 4, %v799
          %v801 = vrot.slane %v375, %v800
          %v802 = vlaneseq
          %v803 = vshrl.u32 %v802, 7
          %v804 = vsub.s32 5, %v803
          %v805 = vrot.slane %v375, %v804
          %v806 = vlaneseq
          %v807 = vshrl.u32 %v806, 7
          %v808 = vsub.s32 6, %v807
          %v809 = vrot.slane %v375, %v808
          %v810 = vlaneseq
          %v811 = vshrl.u32 %v810, 7
          %v812 = vsub.s32 7, %v811
          %v813 = vrot.slane %v375, %v812
          %v814 = vlaneseq
          %v815 = vshrl.u32 %v814, 7
          %v816 = vsub.s32 0, %v815
          %v817 = vrot.slane %v377, %v816
          %v818 = vlaneseq
          %v819 = vshrl.u32 %v818, 7
          %v820 = vsub.s32 1, %v819
          %v821 = vrot.slane %v377, %v820
          %v822 = vlaneseq
          %v823 = vshrl.u32 %v822, 7
          %v824 = vsub.s32 2, %v823
          %v825 = vrot.slane %v377, %v824
          %v826 = vlaneseq
          %v827 = vshrl.u32 %v826, 7
          %v828 = vsub.s32 3, %v827
          %v829 = vrot.slane %v377, %v828
          %v830 = vlaneseq
          %v831 = vshrl.u32 %v830, 7
          %v832 = vsub.s32 4, %v831
          %v833 = vrot.slane %v377, %v832
          %v834 = vlaneseq
          %v835 = vshrl.u32 %v834, 7
          %v836 = vsub.s32 5, %v835
          %v837 = vrot.slane %v377, %v836
          %v838 = vlaneseq
          %v839 = vshrl.u32 %v838, 7
          %v840 = vsub.s32 6, %v839
          %v841 = vrot.slane %v377, %v840
          %v842 = vlaneseq
          %v843 = vshrl.u32 %v842, 7
          %v844 = vsub.s32 7, %v843
          %v845 = vrot.slane %v377, %v844
          %v846 = vlaneseq
          %v847 = vshrl.u32 %v846, 7
          %v848 = vsub.s32 0, %v847
          %v849 = vrot.slane %v379, %v848
          %v850 = vlaneseq
          %v851 = vshrl.u32 %v850, 7
          %v852 = vsub.s32 1, %v851
          %v853 = vrot.slane %v379, %v852
          %v854 = vlaneseq
          %v855 = vshrl.u32 %v854, 7
          %v856 = vsub.s32 2, %v855
          %v857 = vrot.slane %v379, %v856
          %v858 = vlaneseq
          %v859 = vshrl.u32 %v858, 7
          %v860 = vsub.s32 3, %v859
          %v861 = vrot.slane %v379, %v860
          %v862 = vlaneseq
          %v863 = vshrl.u32 %v862, 7
          %v864 = vsub.s32 4, %v863
          %v865 = vrot.slane %v379, %v864
          %v866 = vlaneseq
          %v867 = vshrl.u32 %v866, 7
          %v868 = vsub.s32 5, %v867
          %v869 = vrot.slane %v379, %v868
          %v870 = vlaneseq
          %v871 = vshrl.u32 %v870, 7
          %v872 = vsub.s32 6, %v871
          %v873 = vrot.slane %v379, %v872
          %v874 = vlaneseq
          %v875 = vshrl.u32 %v874, 7
          %v876 = vsub.s32 7, %v875
          %v877 = vrot.slane %v379, %v876
          %v878 = vlaneseq
          %v879 = vshrl.u32 %v878, 7
          %v880 = vsub.s32 0, %v879
          %v881 = vrot.slane %v381, %v880
          %v882 = vlaneseq
          %v883 = vshrl.u32 %v882, 7
          %v884 = vsub.s32 1, %v883
          %v885 = vrot.slane %v381, %v884
          %v886 = vlaneseq
          %v887 = vshrl.u32 %v886, 7
          %v888 = vsub.s32 2, %v887
          %v889 = vrot.slane %v381, %v888
          %v890 = vlaneseq
          %v891 = vshrl.u32 %v890, 7
          %v892 = vsub.s32 3, %v891
          %v893 = vrot.slane %v381, %v892
          %v894 = vlaneseq
          %v895 = vshrl.u32 %v894, 7
          %v896 = vsub.s32 4, %v895
          %v897 = vrot.slane %v381, %v896
          %v898 = vlaneseq
          %v899 = vshrl.u32 %v898, 7
          %v900 = vsub.s32 5, %v899
          %v901 = vrot.slane %v381, %v900
          %v902 = vlaneseq
          %v903 = vshrl.u32 %v902, 7
          %v904 = vsub.s32 6, %v903
          %v905 = vrot.slane %v381, %v904
          %v906 = vlaneseq
          %v907 = vshrl.u32 %v906, 7
          %v908 = vsub.s32 7, %v907
          %v909 = vrot.slane %v381, %v908
          %v910 = vcombine.low %v401, %v405
          %v911 = vcombine.low %v409, %v413
          %v912 = vcombine.low %v417, %v421
          %v913 = vcombine.low %v425, %v429
          %v915 = vunpack.c.l.s4 1966171168
          %v916 = vunpack.c.0.s8 %v915
          %v917 = vlaneseq
          %v918 = vshrl.u32 %v917, 7
          %v919 = vsub.s32 %v916, %v918
          %v920 = vrot.slane %v910, %v919
          %v922 = vunpack.c.l.s4 1966171168
          %v923 = vunpack.c.0.s8 %v922
          %v924 = vlaneseq
          %v925 = vshrl.u32 %v924, 7
          %v926 = vsub.s32 %v923, %v925
          %v927 = vrot.slane %v911, %v926
          %v929 = vunpack.c.l.s4 1966171168
          %v930 = vunpack.c.0.s8 %v929
          %v931 = vlaneseq
          %v932 = vshrl.u32 %v931, 7
          %v933 = vsub.s32 %v930, %v932
          %v934 = vrot.slane %v912, %v933
          %v936 = vunpack.c.l.s4 1966171168
          %v937 = vunpack.c.0.s8 %v936
          %v938 = vlaneseq
          %v939 = vshrl.u32 %v938, 7
          %v940 = vsub.s32 %v937, %v939
          %v941 = vrot.slane %v913, %v940
          %v942 = vcombine.low %v920, %v927
          %v943 = vcombine.low %v934, %v941
          %v945 = vunpack.c.l.s4 1966171168
          %v946 = vunpack.c.0.s8 %v945
          %v947 = vlaneseq
          %v948 = vshrl.u32 %v947, 7
          %v949 = vsub.s32 %v946, %v948
          %v950 = vrot.slane %v942, %v949
          %v952 = vunpack.c.l.s4 1966171168
          %v953 = vunpack.c.0.s8 %v952
          %v954 = vlaneseq
          %v955 = vshrl.u32 %v954, 7
          %v956 = vsub.s32 %v953, %v955
          %v957 = vrot.slane %v943, %v956
          %v958 = vcombine.low %v950, %v957
          %v959 = vcombine.low %v433, %v437
          %v960 = vcombine.low %v441, %v445
          %v961 = vcombine.low %v449, %v453
          %v962 = vcombine.low %v457, %v461
          %v964 = vunpack.c.l.s4 1966171168
          %v965 = vunpack.c.0.s8 %v964
          %v966 = vlaneseq
          %v967 = vshrl.u32 %v966, 7
          %v968 = vsub.s32 %v965, %v967
          %v969 = vrot.slane %v959, %v968
          %v971 = vunpack.c.l.s4 1966171168
          %v972 = vunpack.c.0.s8 %v971
          %v973 = vlaneseq
          %v974 = vshrl.u32 %v973, 7
          %v975 = vsub.s32 %v972, %v974
          %v976 = vrot.slane %v960, %v975
          %v978 = vunpack.c.l.s4 1966171168
          %v979 = vunpack.c.0.s8 %v978
          %v980 = vlaneseq
          %v981 = vshrl.u32 %v980, 7
          %v982 = vsub.s32 %v979, %v981
          %v983 = vrot.slane %v961, %v982
          %v985 = vunpack.c.l.s4 1966171168
          %v986 = vunpack.c.0.s8 %v985
          %v987 = vlaneseq
          %v988 = vshrl.u32 %v987, 7
          %v989 = vsub.s32 %v986, %v988
          %v990 = vrot.slane %v962, %v989
          %v991 = vcombine.low %v969, %v976
          %v992 = vcombine.low %v983, %v990
          %v994 = vunpack.c.l.s4 1966171168
          %v995 = vunpack.c.0.s8 %v994
          %v996 = vlaneseq
          %v997 = vshrl.u32 %v996, 7
          %v998 = vsub.s32 %v995, %v997
          %v999 = vrot.slane %v991, %v998
          %v1001 = vunpack.c.l.s4 1966171168
          %v1002 = vunpack.c.0.s8 %v1001
          %v1003 = vlaneseq
          %v1004 = vshrl.u32 %v1003, 7
          %v1005 = vsub.s32 %v1002, %v1004
          %v1006 = vrot.slane %v992, %v1005
          %v1007 = vcombine.low %v999, %v1006
          %v1008 = vcombine.low %v465, %v469
          %v1009 = vcombine.low %v473, %v477
          %v1010 = vcombine.low %v481, %v485
          %v1011 = vcombine.low %v489, %v493
          %v1013 = vunpack.c.l.s4 1966171168
          %v1014 = vunpack.c.0.s8 %v1013
          %v1015 = vlaneseq
          %v1016 = vshrl.u32 %v1015, 7
          %v1017 = vsub.s32 %v1014, %v1016
          %v1018 = vrot.slane %v1008, %v1017
          %v1020 = vunpack.c.l.s4 1966171168
          %v1021 = vunpack.c.0.s8 %v1020
          %v1022 = vlaneseq
          %v1023 = vshrl.u32 %v1022, 7
          %v1024 = vsub.s32 %v1021, %v1023
          %v1025 = vrot.slane %v1009, %v1024
          %v1027 = vunpack.c.l.s4 1966171168
          %v1028 = vunpack.c.0.s8 %v1027
          %v1029 = vlaneseq
          %v1030 = vshrl.u32 %v1029, 7
          %v1031 = vsub.s32 %v1028, %v1030
          %v1032 = vrot.slane %v1010, %v1031
          %v1034 = vunpack.c.l.s4 1966171168
          %v1035 = vunpack.c.0.s8 %v1034
          %v1036 = vlaneseq
          %v1037 = vshrl.u32 %v1036, 7
          %v1038 = vsub.s32 %v1035, %v1037
          %v1039 = vrot.slane %v1011, %v1038
          %v1040 = vcombine.low %v1018, %v1025
          %v1041 = vcombine.low %v1032, %v1039
          %v1043 = vunpack.c.l.s4 1966171168
          %v1044 = vunpack.c.0.s8 %v1043
          %v1045 = vlaneseq
          %v1046 = vshrl.u32 %v1045, 7
          %v1047 = vsub.s32 %v1044, %v1046
          %v1048 = vrot.slane %v1040, %v1047
          %v1050 = vunpack.c.l.s4 1966171168
          %v1051 = vunpack.c.0.s8 %v1050
          %v1052 = vlaneseq
          %v1053 = vshrl.u32 %v1052, 7
          %v1054 = vsub.s32 %v1051, %v1053
          %v1055 = vrot.slane %v1041, %v1054
          %v1056 = vcombine.low %v1048, %v1055
          %v1057 = vcombine.low %v497, %v501
          %v1058 = vcombine.low %v505, %v509
          %v1059 = vcombine.low %v513, %v517
          %v1060 = vcombine.low %v521, %v525
          %v1062 = vunpack.c.l.s4 1966171168
          %v1063 = vunpack.c.0.s8 %v1062
          %v1064 = vlaneseq
          %v1065 = vshrl.u32 %v1064, 7
          %v1066 = vsub.s32 %v1063, %v1065
          %v1067 = vrot.slane %v1057, %v1066
          %v1069 = vunpack.c.l.s4 1966171168
          %v1070 = vunpack.c.0.s8 %v1069
          %v1071 = vlaneseq
          %v1072 = vshrl.u32 %v1071, 7
          %v1073 = vsub.s32 %v1070, %v1072
          %v1074 = vrot.slane %v1058, %v1073
          %v1076 = vunpack.c.l.s4 1966171168
          %v1077 = vunpack.c.0.s8 %v1076
          %v1078 = vlaneseq
          %v1079 = vshrl.u32 %v1078, 7
          %v1080 = vsub.s32 %v1077, %v1079
          %v1081 = vrot.slane %v1059, %v1080
          %v1083 = vunpack.c.l.s4 1966171168
          %v1084 = vunpack.c.0.s8 %v1083
          %v1085 = vlaneseq
          %v1086 = vshrl.u32 %v1085, 7
          %v1087 = vsub.s32 %v1084, %v1086
          %v1088 = vrot.slane %v1060, %v1087
          %v1089 = vcombine.low %v1067, %v1074
          %v1090 = vcombine.low %v1081, %v1088
          %v1092 = vunpack.c.l.s4 1966171168
          %v1093 = vunpack.c.0.s8 %v1092
          %v1094 = vlaneseq
          %v1095 = vshrl.u32 %v1094, 7
          %v1096 = vsub.s32 %v1093, %v1095
          %v1097 = vrot.slane %v1089, %v1096
          %v1099 = vunpack.c.l.s4 1966171168
          %v1100 = vunpack.c.0.s8 %v1099
          %v1101 = vlaneseq
          %v1102 = vshrl.u32 %v1101, 7
          %v1103 = vsub.s32 %v1100, %v1102
          %v1104 = vrot.slane %v1090, %v1103
          %v1105 = vcombine.low %v1097, %v1104
          %v1106 = vcombine.low %v529, %v533
          %v1107 = vcombine.low %v537, %v541
          %v1108 = vcombine.low %v545, %v549
          %v1109 = vcombine.low %v553, %v557
          %v1111 = vunpack.c.l.s4 1966171168
          %v1112 = vunpack.c.0.s8 %v1111
          %v1113 = vlaneseq
          %v1114 = vshrl.u32 %v1113, 7
          %v1115 = vsub.s32 %v1112, %v1114
          %v1116 = vrot.slane %v1106, %v1115
          %v1118 = vunpack.c.l.s4 1966171168
          %v1119 = vunpack.c.0.s8 %v1118
          %v1120 = vlaneseq
          %v1121 = vshrl.u32 %v1120, 7
          %v1122 = vsub.s32 %v1119, %v1121
          %v1123 = vrot.slane %v1107, %v1122
          %v1125 = vunpack.c.l.s4 1966171168
          %v1126 = vunpack.c.0.s8 %v1125
          %v1127 = vlaneseq
          %v1128 = vshrl.u32 %v1127, 7
          %v1129 = vsub.s32 %v1126, %v1128
          %v1130 = vrot.slane %v1108, %v1129
          %v1132 = vunpack.c.l.s4 1966171168
          %v1133 = vunpack.c.0.s8 %v1132
          %v1134 = vlaneseq
          %v1135 = vshrl.u32 %v1134, 7
          %v1136 = vsub.s32 %v1133, %v1135
          %v1137 = vrot.slane %v1109, %v1136
          %v1138 = vcombine.low %v1116, %v1123
          %v1139 = vcombine.low %v1130, %v1137
          %v1141 = vunpack.c.l.s4 1966171168
          %v1142 = vunpack.c.0.s8 %v1141
          %v1143 = vlaneseq
          %v1144 = vshrl.u32 %v1143, 7
          %v1145 = vsub.s32 %v1142, %v1144
          %v1146 = vrot.slane %v1138, %v1145
          %v1148 = vunpack.c.l.s4 1966171168
          %v1149 = vunpack.c.0.s8 %v1148
          %v1150 = vlaneseq
          %v1151 = vshrl.u32 %v1150, 7
          %v1152 = vsub.s32 %v1149, %v1151
          %v1153 = vrot.slane %v1139, %v1152
          %v1154 = vcombine.low %v1146, %v1153
          %v1155 = vcombine.low %v561, %v565
          %v1156 = vcombine.low %v569, %v573
          %v1157 = vcombine.low %v577, %v581
          %v1158 = vcombine.low %v585, %v589
          %v1160 = vunpack.c.l.s4 1966171168
          %v1161 = vunpack.c.0.s8 %v1160
          %v1162 = vlaneseq
          %v1163 = vshrl.u32 %v1162, 7
          %v1164 = vsub.s32 %v1161, %v1163
          %v1165 = vrot.slane %v1155, %v1164
          %v1167 = vunpack.c.l.s4 1966171168
          %v1168 = vunpack.c.0.s8 %v1167
          %v1169 = vlaneseq
          %v1170 = vshrl.u32 %v1169, 7
          %v1171 = vsub.s32 %v1168, %v1170
          %v1172 = vrot.slane %v1156, %v1171
          %v1174 = vunpack.c.l.s4 1966171168
          %v1175 = vunpack.c.0.s8 %v1174
          %v1176 = vlaneseq
          %v1177 = vshrl.u32 %v1176, 7
          %v1178 = vsub.s32 %v1175, %v1177
          %v1179 = vrot.slane %v1157, %v1178
          %v1181 = vunpack.c.l.s4 1966171168
          %v1182 = vunpack.c.0.s8 %v1181
          %v1183 = vlaneseq
          %v1184 = vshrl.u32 %v1183, 7
          %v1185 = vsub.s32 %v1182, %v1184
          %v1186 = vrot.slane %v1158, %v1185
          %v1187 = vcombine.low %v1165, %v1172
          %v1188 = vcombine.low %v1179, %v1186
          %v1190 = vunpack.c.l.s4 1966171168
          %v1191 = vunpack.c.0.s8 %v1190
          %v1192 = vlaneseq
          %v1193 = vshrl.u32 %v1192, 7
          %v1194 = vsub.s32 %v1191, %v1193
          %v1195 = vrot.slane %v1187, %v1194
          %v1197 = vunpack.c.l.s4 1966171168
          %v1198 = vunpack.c.0.s8 %v1197
          %v1199 = vlaneseq
          %v1200 = vshrl.u32 %v1199, 7
          %v1201 = vsub.s32 %v1198, %v1200
          %v1202 = vrot.slane %v1188, %v1201
          %v1203 = vcombine.low %v1195, %v1202
          %v1204 = vcombine.low %v593, %v597
          %v1205 = vcombine.low %v601, %v605
          %v1206 = vcombine.low %v609, %v613
          %v1207 = vcombine.low %v617, %v621
          %v1209 = vunpack.c.l.s4 1966171168
          %v1210 = vunpack.c.0.s8 %v1209
          %v1211 = vlaneseq
          %v1212 = vshrl.u32 %v1211, 7
          %v1213 = vsub.s32 %v1210, %v1212
          %v1214 = vrot.slane %v1204, %v1213
          %v1216 = vunpack.c.l.s4 1966171168
          %v1217 = vunpack.c.0.s8 %v1216
          %v1218 = vlaneseq
          %v1219 = vshrl.u32 %v1218, 7
          %v1220 = vsub.s32 %v1217, %v1219
          %v1221 = vrot.slane %v1205, %v1220
          %v1223 = vunpack.c.l.s4 1966171168
          %v1224 = vunpack.c.0.s8 %v1223
          %v1225 = vlaneseq
          %v1226 = vshrl.u32 %v1225, 7
          %v1227 = vsub.s32 %v1224, %v1226
          %v1228 = vrot.slane %v1206, %v1227
          %v1230 = vunpack.c.l.s4 1966171168
          %v1231 = vunpack.c.0.s8 %v1230
          %v1232 = vlaneseq
          %v1233 = vshrl.u32 %v1232, 7
          %v1234 = vsub.s32 %v1231, %v1233
          %v1235 = vrot.slane %v1207, %v1234
          %v1236 = vcombine.low %v1214, %v1221
          %v1237 = vcombine.low %v1228, %v1235
          %v1239 = vunpack.c.l.s4 1966171168
          %v1240 = vunpack.c.0.s8 %v1239
          %v1241 = vlaneseq
          %v1242 = vshrl.u32 %v1241, 7
          %v1243 = vsub.s32 %v1240, %v1242
          %v1244 = vrot.slane %v1236, %v1243
          %v1246 = vunpack.c.l.s4 1966171168
          %v1247 = vunpack.c.0.s8 %v1246
          %v1248 = vlaneseq
          %v1249 = vshrl.u32 %v1248, 7
          %v1250 = vsub.s32 %v1247, %v1249
          %v1251 = vrot.slane %v1237, %v1250
          %v1252 = vcombine.low %v1244, %v1251
          %v1253 = vcombine.low %v625, %v629
          %v1254 = vcombine.low %v633, %v637
          %v1255 = vcombine.low %v641, %v645
          %v1256 = vcombine.low %v649, %v653
          %v1258 = vunpack.c.l.s4 1966171168
          %v1259 = vunpack.c.0.s8 %v1258
          %v1260 = vlaneseq
          %v1261 = vshrl.u32 %v1260, 7
          %v1262 = vsub.s32 %v1259, %v1261
          %v1263 = vrot.slane %v1253, %v1262
          %v1265 = vunpack.c.l.s4 1966171168
          %v1266 = vunpack.c.0.s8 %v1265
          %v1267 = vlaneseq
          %v1268 = vshrl.u32 %v1267, 7
          %v1269 = vsub.s32 %v1266, %v1268
          %v1270 = vrot.slane %v1254, %v1269
          %v1272 = vunpack.c.l.s4 1966171168
          %v1273 = vunpack.c.0.s8 %v1272
          %v1274 = vlaneseq
          %v1275 = vshrl.u32 %v1274, 7
          %v1276 = vsub.s32 %v1273, %v1275
          %v1277 = vrot.slane %v1255, %v1276
          %v1279 = vunpack.c.l.s4 1966171168
          %v1280 = vunpack.c.0.s8 %v1279
          %v1281 = vlaneseq
          %v1282 = vshrl.u32 %v1281, 7
          %v1283 = vsub.s32 %v1280, %v1282
          %v1284 = vrot.slane %v1256, %v1283
          %v1285 = vcombine.low %v1263, %v1270
          %v1286 = vcombine.low %v1277, %v1284
          %v1288 = vunpack.c.l.s4 1966171168
          %v1289 = vunpack.c.0.s8 %v1288
          %v1290 = vlaneseq
          %v1291 = vshrl.u32 %v1290, 7
          %v1292 = vsub.s32 %v1289, %v1291
          %v1293 = vrot.slane %v1285, %v1292
          %v1295 = vunpack.c.l.s4 1966171168
          %v1296 = vunpack.c.0.s8 %v1295
          %v1297 = vlaneseq
          %v1298 = vshrl.u32 %v1297, 7
          %v1299 = vsub.s32 %v1296, %v1298
          %v1300 = vrot.slane %v1286, %v1299
          %v1301 = vcombine.low %v1293, %v1300
          %v1302 = vcombine.low %v657, %v661
          %v1303 = vcombine.low %v665, %v669
          %v1304 = vcombine.low %v673, %v677
          %v1305 = vcombine.low %v681, %v685
          %v1307 = vunpack.c.l.s4 1966171168
          %v1308 = vunpack.c.0.s8 %v1307
          %v1309 = vlaneseq
          %v1310 = vshrl.u32 %v1309, 7
          %v1311 = vsub.s32 %v1308, %v1310
          %v1312 = vrot.slane %v1302, %v1311
          %v1314 = vunpack.c.l.s4 1966171168
          %v1315 = vunpack.c.0.s8 %v1314
          %v1316 = vlaneseq
          %v1317 = vshrl.u32 %v1316, 7
          %v1318 = vsub.s32 %v1315, %v1317
          %v1319 = vrot.slane %v1303, %v1318
          %v1321 = vunpack.c.l.s4 1966171168
          %v1322 = vunpack.c.0.s8 %v1321
          %v1323 = vlaneseq
          %v1324 = vshrl.u32 %v1323, 7
          %v1325 = vsub.s32 %v1322, %v1324
          %v1326 = vrot.slane %v1304, %v1325
          %v1328 = vunpack.c.l.s4 1966171168
          %v1329 = vunpack.c.0.s8 %v1328
          %v1330 = vlaneseq
          %v1331 = vshrl.u32 %v1330, 7
          %v1332 = vsub.s32 %v1329, %v1331
          %v1333 = vrot.slane %v1305, %v1332
          %v1334 = vcombine.low %v1312, %v1319
          %v1335 = vcombine.low %v1326, %v1333
          %v1337 = vunpack.c.l.s4 1966171168
          %v1338 = vunpack.c.0.s8 %v1337
          %v1339 = vlaneseq
          %v1340 = vshrl.u32 %v1339, 7
          %v1341 = vsub.s32 %v1338, %v1340
          %v1342 = vrot.slane %v1334, %v1341
          %v1344 = vunpack.c.l.s4 1966171168
          %v1345 = vunpack.c.0.s8 %v1344
          %v1346 = vlaneseq
          %v1347 = vshrl.u32 %v1346, 7
          %v1348 = vsub.s32 %v1345, %v1347
          %v1349 = vrot.slane %v1335, %v1348
          %v1350 = vcombine.low %v1342, %v1349
          %v1351 = vcombine.low %v689, %v693
          %v1352 = vcombine.low %v697, %v701
          %v1353 = vcombine.low %v705, %v709
          %v1354 = vcombine.low %v713, %v717
          %v1356 = vunpack.c.l.s4 1966171168
          %v1357 = vunpack.c.0.s8 %v1356
          %v1358 = vlaneseq
          %v1359 = vshrl.u32 %v1358, 7
          %v1360 = vsub.s32 %v1357, %v1359
          %v1361 = vrot.slane %v1351, %v1360
          %v1363 = vunpack.c.l.s4 1966171168
          %v1364 = vunpack.c.0.s8 %v1363
          %v1365 = vlaneseq
          %v1366 = vshrl.u32 %v1365, 7
          %v1367 = vsub.s32 %v1364, %v1366
          %v1368 = vrot.slane %v1352, %v1367
          %v1370 = vunpack.c.l.s4 1966171168
          %v1371 = vunpack.c.0.s8 %v1370
          %v1372 = vlaneseq
          %v1373 = vshrl.u32 %v1372, 7
          %v1374 = vsub.s32 %v1371, %v1373
          %v1375 = vrot.slane %v1353, %v1374
          %v1377 = vunpack.c.l.s4 1966171168
          %v1378 = vunpack.c.0.s8 %v1377
          %v1379 = vlaneseq
          %v1380 = vshrl.u32 %v1379, 7
          %v1381 = vsub.s32 %v1378, %v1380
          %v1382 = vrot.slane %v1354, %v1381
          %v1383 = vcombine.low %v1361, %v1368
          %v1384 = vcombine.low %v1375, %v1382
          %v1386 = vunpack.c.l.s4 1966171168
          %v1387 = vunpack.c.0.s8 %v1386
          %v1388 = vlaneseq
          %v1389 = vshrl.u32 %v1388, 7
          %v1390 = vsub.s32 %v1387, %v1389
          %v1391 = vrot.slane %v1383, %v1390
          %v1393 = vunpack.c.l.s4 1966171168
          %v1394 = vunpack.c.0.s8 %v1393
          %v1395 = vlaneseq
          %v1396 = vshrl.u32 %v1395, 7
          %v1397 = vsub.s32 %v1394, %v1396
          %v1398 = vrot.slane %v1384, %v1397
          %v1399 = vcombine.low %v1391, %v1398
          %v1400 = vcombine.low %v721, %v725
          %v1401 = vcombine.low %v729, %v733
          %v1402 = vcombine.low %v737, %v741
          %v1403 = vcombine.low %v745, %v749
          %v1405 = vunpack.c.l.s4 1966171168
          %v1406 = vunpack.c.0.s8 %v1405
          %v1407 = vlaneseq
          %v1408 = vshrl.u32 %v1407, 7
          %v1409 = vsub.s32 %v1406, %v1408
          %v1410 = vrot.slane %v1400, %v1409
          %v1412 = vunpack.c.l.s4 1966171168
          %v1413 = vunpack.c.0.s8 %v1412
          %v1414 = vlaneseq
          %v1415 = vshrl.u32 %v1414, 7
          %v1416 = vsub.s32 %v1413, %v1415
          %v1417 = vrot.slane %v1401, %v1416
          %v1419 = vunpack.c.l.s4 1966171168
          %v1420 = vunpack.c.0.s8 %v1419
          %v1421 = vlaneseq
          %v1422 = vshrl.u32 %v1421, 7
          %v1423 = vsub.s32 %v1420, %v1422
          %v1424 = vrot.slane %v1402, %v1423
          %v1426 = vunpack.c.l.s4 1966171168
          %v1427 = vunpack.c.0.s8 %v1426
          %v1428 = vlaneseq
          %v1429 = vshrl.u32 %v1428, 7
          %v1430 = vsub.s32 %v1427, %v1429
          %v1431 = vrot.slane %v1403, %v1430
          %v1432 = vcombine.low %v1410, %v1417
          %v1433 = vcombine.low %v1424, %v1431
          %v1435 = vunpack.c.l.s4 1966171168
          %v1436 = vunpack.c.0.s8 %v1435
          %v1437 = vlaneseq
          %v1438 = vshrl.u32 %v1437, 7
          %v1439 = vsub.s32 %v1436, %v1438
          %v1440 = vrot.slane %v1432, %v1439
          %v1442 = vunpack.c.l.s4 1966171168
          %v1443 = vunpack.c.0.s8 %v1442
          %v1444 = vlaneseq
          %v1445 = vshrl.u32 %v1444, 7
          %v1446 = vsub.s32 %v1443, %v1445
          %v1447 = vrot.slane %v1433, %v1446
          %v1448 = vcombine.low %v1440, %v1447
          %v1449 = vcombine.low %v753, %v757
          %v1450 = vcombine.low %v761, %v765
          %v1451 = vcombine.low %v769, %v773
          %v1452 = vcombine.low %v777, %v781
          %v1454 = vunpack.c.l.s4 1966171168
          %v1455 = vunpack.c.0.s8 %v1454
          %v1456 = vlaneseq
          %v1457 = vshrl.u32 %v1456, 7
          %v1458 = vsub.s32 %v1455, %v1457
          %v1459 = vrot.slane %v1449, %v1458
          %v1461 = vunpack.c.l.s4 1966171168
          %v1462 = vunpack.c.0.s8 %v1461
          %v1463 = vlaneseq
          %v1464 = vshrl.u32 %v1463, 7
          %v1465 = vsub.s32 %v1462, %v1464
          %v1466 = vrot.slane %v1450, %v1465
          %v1468 = vunpack.c.l.s4 1966171168
          %v1469 = vunpack.c.0.s8 %v1468
          %v1470 = vlaneseq
          %v1471 = vshrl.u32 %v1470, 7
          %v1472 = vsub.s32 %v1469, %v1471
          %v1473 = vrot.slane %v1451, %v1472
          %v1475 = vunpack.c.l.s4 1966171168
          %v1476 = vunpack.c.0.s8 %v1475
          %v1477 = vlaneseq
          %v1478 = vshrl.u32 %v1477, 7
          %v1479 = vsub.s32 %v1476, %v1478
          %v1480 = vrot.slane %v1452, %v1479
          %v1481 = vcombine.low %v1459, %v1466
          %v1482 = vcombine.low %v1473, %v1480
          %v1484 = vunpack.c.l.s4 1966171168
          %v1485 = vunpack.c.0.s8 %v1484
          %v1486 = vlaneseq
          %v1487 = vshrl.u32 %v1486, 7
          %v1488 = vsub.s32 %v1485, %v1487
          %v1489 = vrot.slane %v1481, %v1488
          %v1491 = vunpack.c.l.s4 1966171168
          %v1492 = vunpack.c.0.s8 %v1491
          %v1493 = vlaneseq
          %v1494 = vshrl.u32 %v1493, 7
          %v1495 = vsub.s32 %v1492, %v1494
          %v1496 = vrot.slane %v1482, %v1495
          %v1497 = vcombine.low %v1489, %v1496
          %v1498 = vcombine.low %v785, %v789
          %v1499 = vcombine.low %v793, %v797
          %v1500 = vcombine.low %v801, %v805
          %v1501 = vcombine.low %v809, %v813
          %v1503 = vunpack.c.l.s4 1966171168
          %v1504 = vunpack.c.0.s8 %v1503
          %v1505 = vlaneseq
          %v1506 = vshrl.u32 %v1505, 7
          %v1507 = vsub.s32 %v1504, %v1506
          %v1508 = vrot.slane %v1498, %v1507
          %v1510 = vunpack.c.l.s4 1966171168
          %v1511 = vunpack.c.0.s8 %v1510
          %v1512 = vlaneseq
          %v1513 = vshrl.u32 %v1512, 7
          %v1514 = vsub.s32 %v1511, %v1513
          %v1515 = vrot.slane %v1499, %v1514
          %v1517 = vunpack.c.l.s4 1966171168
          %v1518 = vunpack.c.0.s8 %v1517
          %v1519 = vlaneseq
          %v1520 = vshrl.u32 %v1519, 7
          %v1521 = vsub.s32 %v1518, %v1520
          %v1522 = vrot.slane %v1500, %v1521
          %v1524 = vunpack.c.l.s4 1966171168
          %v1525 = vunpack.c.0.s8 %v1524
          %v1526 = vlaneseq
          %v1527 = vshrl.u32 %v1526, 7
          %v1528 = vsub.s32 %v1525, %v1527
          %v1529 = vrot.slane %v1501, %v1528
          %v1530 = vcombine.low %v1508, %v1515
          %v1531 = vcombine.low %v1522, %v1529
          %v1533 = vunpack.c.l.s4 1966171168
          %v1534 = vunpack.c.0.s8 %v1533
          %v1535 = vlaneseq
          %v1536 = vshrl.u32 %v1535, 7
          %v1537 = vsub.s32 %v1534, %v1536
          %v1538 = vrot.slane %v1530, %v1537
          %v1540 = vunpack.c.l.s4 1966171168
          %v1541 = vunpack.c.0.s8 %v1540
          %v1542 = vlaneseq
          %v1543 = vshrl.u32 %v1542, 7
          %v1544 = vsub.s32 %v1541, %v1543
          %v1545 = vrot.slane %v1531, %v1544
          %v1546 = vcombine.low %v1538, %v1545
          %v1547 = vcombine.low %v817, %v821
          %v1548 = vcombine.low %v825, %v829
          %v1549 = vcombine.low %v833, %v837
          %v1550 = vcombine.low %v841, %v845
          %v1552 = vunpack.c.l.s4 1966171168
          %v1553 = vunpack.c.0.s8 %v1552
          %v1554 = vlaneseq
          %v1555 = vshrl.u32 %v1554, 7
          %v1556 = vsub.s32 %v1553, %v1555
          %v1557 = vrot.slane %v1547, %v1556
          %v1559 = vunpack.c.l.s4 1966171168
          %v1560 = vunpack.c.0.s8 %v1559
          %v1561 = vlaneseq
          %v1562 = vshrl.u32 %v1561, 7
          %v1563 = vsub.s32 %v1560, %v1562
          %v1564 = vrot.slane %v1548, %v1563
          %v1566 = vunpack.c.l.s4 1966171168
          %v1567 = vunpack.c.0.s8 %v1566
          %v1568 = vlaneseq
          %v1569 = vshrl.u32 %v1568, 7
          %v1570 = vsub.s32 %v1567, %v1569
          %v1571 = vrot.slane %v1549, %v1570
          %v1573 = vunpack.c.l.s4 1966171168
          %v1574 = vunpack.c.0.s8 %v1573
          %v1575 = vlaneseq
          %v1576 = vshrl.u32 %v1575, 7
          %v1577 = vsub.s32 %v1574, %v1576
          %v1578 = vrot.slane %v1550, %v1577
          %v1579 = vcombine.low %v1557, %v1564
          %v1580 = vcombine.low %v1571, %v1578
          %v1582 = vunpack.c.l.s4 1966171168
          %v1583 = vunpack.c.0.s8 %v1582
          %v1584 = vlaneseq
          %v1585 = vshrl.u32 %v1584, 7
          %v1586 = vsub.s32 %v1583, %v1585
          %v1587 = vrot.slane %v1579, %v1586
          %v1589 = vunpack.c.l.s4 1966171168
          %v1590 = vunpack.c.0.s8 %v1589
          %v1591 = vlaneseq
          %v1592 = vshrl.u32 %v1591, 7
          %v1593 = vsub.s32 %v1590, %v1592
          %v1594 = vrot.slane %v1580, %v1593
          %v1595 = vcombine.low %v1587, %v1594
          %v1596 = vcombine.low %v849, %v853
          %v1597 = vcombine.low %v857, %v861
          %v1598 = vcombine.low %v865, %v869
          %v1599 = vcombine.low %v873, %v877
          %v1601 = vunpack.c.l.s4 1966171168
          %v1602 = vunpack.c.0.s8 %v1601
          %v1603 = vlaneseq
          %v1604 = vshrl.u32 %v1603, 7
          %v1605 = vsub.s32 %v1602, %v1604
          %v1606 = vrot.slane %v1596, %v1605
          %v1608 = vunpack.c.l.s4 1966171168
          %v1609 = vunpack.c.0.s8 %v1608
          %v1610 = vlaneseq
          %v1611 = vshrl.u32 %v1610, 7
          %v1612 = vsub.s32 %v1609, %v1611
          %v1613 = vrot.slane %v1597, %v1612
          %v1615 = vunpack.c.l.s4 1966171168
          %v1616 = vunpack.c.0.s8 %v1615
          %v1617 = vlaneseq
          %v1618 = vshrl.u32 %v1617, 7
          %v1619 = vsub.s32 %v1616, %v1618
          %v1620 = vrot.slane %v1598, %v1619
          %v1622 = vunpack.c.l.s4 1966171168
          %v1623 = vunpack.c.0.s8 %v1622
          %v1624 = vlaneseq
          %v1625 = vshrl.u32 %v1624, 7
          %v1626 = vsub.s32 %v1623, %v1625
          %v1627 = vrot.slane %v1599, %v1626
          %v1628 = vcombine.low %v1606, %v1613
          %v1629 = vcombine.low %v1620, %v1627
          %v1631 = vunpack.c.l.s4 1966171168
          %v1632 = vunpack.c.0.s8 %v1631
          %v1633 = vlaneseq
          %v1634 = vshrl.u32 %v1633, 7
          %v1635 = vsub.s32 %v1632, %v1634
          %v1636 = vrot.slane %v1628, %v1635
          %v1638 = vunpack.c.l.s4 1966171168
          %v1639 = vunpack.c.0.s8 %v1638
          %v1640 = vlaneseq
          %v1641 = vshrl.u32 %v1640, 7
          %v1642 = vsub.s32 %v1639, %v1641
          %v1643 = vrot.slane %v1629, %v1642
          %v1644 = vcombine.low %v1636, %v1643
          %v1645 = vcombine.low %v881, %v885
          %v1646 = vcombine.low %v889, %v893
          %v1647 = vcombine.low %v897, %v901
          %v1648 = vcombine.low %v905, %v909
          %v1650 = vunpack.c.l.s4 1966171168
          %v1651 = vunpack.c.0.s8 %v1650
          %v1652 = vlaneseq
          %v1653 = vshrl.u32 %v1652, 7
          %v1654 = vsub.s32 %v1651, %v1653
          %v1655 = vrot.slane %v1645, %v1654
          %v1657 = vunpack.c.l.s4 1966171168
          %v1658 = vunpack.c.0.s8 %v1657
          %v1659 = vlaneseq
          %v1660 = vshrl.u32 %v1659, 7
          %v1661 = vsub.s32 %v1658, %v1660
          %v1662 = vrot.slane %v1646, %v1661
          %v1664 = vunpack.c.l.s4 1966171168
          %v1665 = vunpack.c.0.s8 %v1664
          %v1666 = vlaneseq
          %v1667 = vshrl.u32 %v1666, 7
          %v1668 = vsub.s32 %v1665, %v1667
          %v1669 = vrot.slane %v1647, %v1668
          %v1671 = vunpack.c.l.s4 1966171168
          %v1672 = vunpack.c.0.s8 %v1671
          %v1673 = vlaneseq
          %v1674 = vshrl.u32 %v1673, 7
          %v1675 = vsub.s32 %v1672, %v1674
          %v1676 = vrot.slane %v1648, %v1675
          %v1677 = vcombine.low %v1655, %v1662
          %v1678 = vcombine.low %v1669, %v1676
          %v1680 = vunpack.c.l.s4 1966171168
          %v1681 = vunpack.c.0.s8 %v1680
          %v1682 = vlaneseq
          %v1683 = vshrl.u32 %v1682, 7
          %v1684 = vsub.s32 %v1681, %v1683
          %v1685 = vrot.slane %v1677, %v1684
          %v1687 = vunpack.c.l.s4 1966171168
          %v1688 = vunpack.c.0.s8 %v1687
          %v1689 = vlaneseq
          %v1690 = vshrl.u32 %v1689, 7
          %v1691 = vsub.s32 %v1688, %v1690
          %v1692 = vrot.slane %v1678, %v1691
          %v1693 = vcombine.low %v1685, %v1692
          %1694 = vset.pattern.permute.xlu0 0
          %1695 = vperm.xlu0 %1694, %v958
          %v1696 = vpop.permute.xlu0 %1695
          %1697 = vset.pattern.permute.xlu0 0
          %1698 = vperm.xlu0 %1697, %v1007
          %v1699 = vpop.permute.xlu0 %1698
          %1700 = vset.pattern.permute.xlu0 0
          %1701 = vperm.xlu0 %1700, %v1056
          %v1702 = vpop.permute.xlu0 %1701
          %1703 = vset.pattern.permute.xlu0 0
          %1704 = vperm.xlu0 %1703, %v1105
          %v1705 = vpop.permute.xlu0 %1704
          %1706 = vset.pattern.permute.xlu0 0
          %1707 = vperm.xlu0 %1706, %v1154
          %v1708 = vpop.permute.xlu0 %1707
          %1709 = vset.pattern.permute.xlu0 0
          %1710 = vperm.xlu0 %1709, %v1203
          %v1711 = vpop.permute.xlu0 %1710
          %1712 = vset.pattern.permute.xlu0 0
          %1713 = vperm.xlu0 %1712, %v1252
          %v1714 = vpop.permute.xlu0 %1713
          %1715 = vset.pattern.permute.xlu0 0
          %1716 = vperm.xlu0 %1715, %v1301
          %v1717 = vpop.permute.xlu0 %1716
          %1718 = vset.pattern.permute.xlu0 0
          %1719 = vperm.xlu0 %1718, %v1350
          %v1720 = vpop.permute.xlu0 %1719
          %1721 = vset.pattern.permute.xlu0 0
          %1722 = vperm.xlu0 %1721, %v1399
          %v1723 = vpop.permute.xlu0 %1722
          %1724 = vset.pattern.permute.xlu0 0
          %1725 = vperm.xlu0 %1724, %v1448
          %v1726 = vpop.permute.xlu0 %1725
          %1727 = vset.pattern.permute.xlu0 0
          %1728 = vperm.xlu0 %1727, %v1497
          %v1729 = vpop.permute.xlu0 %1728
          %1730 = vset.pattern.permute.xlu0 0
          %1731 = vperm.xlu0 %1730, %v1546
          %v1732 = vpop.permute.xlu0 %1731
          %1733 = vset.pattern.permute.xlu0 0
          %1734 = vperm.xlu0 %1733, %v1595
          %v1735 = vpop.permute.xlu0 %1734
          %1736 = vset.pattern.permute.xlu0 0
          %1737 = vperm.xlu0 %1736, %v1644
          %v1738 = vpop.permute.xlu0 %1737
          %1739 = vset.pattern.permute.xlu0 0
          %1740 = vperm.xlu0 %1739, %v1693
          %v1741 = vpop.permute.xlu0 %1740
          %v1742 = vlaneseq
          %v1743 = vand.u32 %v1742, 127
          %v1744 = vlaneseq
          %v1745 = vshrl.u32 %v1744, 7
          %v1746 = vsub.s32 %v1743, %v1745
          %v1747 = vrot.slane %v1696, %v1746
          %v1748 = vadd.s32 %v1743, 4294967288
          %v1749 = vlaneseq
          %v1750 = vshrl.u32 %v1749, 7
          %v1751 = vsub.s32 %v1748, %v1750
          %v1752 = vrot.slane %v1699, %v1751
          %vm1753 = vcmask 130112
          %v1754 = vsel %vm1753, %v1752, %v1747
          %v1755 = vadd.s32 %v1743, 4294967280
          %v1756 = vlaneseq
          %v1757 = vshrl.u32 %v1756, 7
          %v1758 = vsub.s32 %v1755, %v1757
          %v1759 = vrot.slane %v1702, %v1758
          %vm1760 = vcmask 195712
          %v1761 = vsel %vm1760, %v1759, %v1754
          %v1762 = vadd.s32 %v1743, 4294967272
          %v1763 = vlaneseq
          %v1764 = vshrl.u32 %v1763, 7
          %v1765 = vsub.s32 %v1762, %v1764
          %v1766 = vrot.slane %v1705, %v1765
          %vm1767 = vcmask 261312
          %v1768 = vsel %vm1767, %v1766, %v1761
          %v1769 = vadd.s32 %v1743, 4294967264
          %v1770 = vlaneseq
          %v1771 = vshrl.u32 %v1770, 7
          %v1772 = vsub.s32 %v1769, %v1771
          %v1773 = vrot.slane %v1708, %v1772
          %vm1774 = vcmask 326912
          %v1775 = vsel %vm1774, %v1773, %v1768
          %v1776 = vadd.s32 %v1743, 4294967256
          %v1777 = vlaneseq
          %v1778 = vshrl.u32 %v1777, 7
          %v1779 = vsub.s32 %v1776, %v1778
          %v1780 = vrot.slane %v1711, %v1779
          %vm1781 = vcmask 392512
          %v1782 = vsel %vm1781, %v1780, %v1775
          %v1783 = vadd.s32 %v1743, 4294967248
          %v1784 = vlaneseq
          %v1785 = vshrl.u32 %v1784, 7
          %v1786 = vsub.s32 %v1783, %v1785
          %v1787 = vrot.slane %v1714, %v1786
          %vm1788 = vcmask 458112
          %v1789 = vsel %vm1788, %v1787, %v1782
          %v1790 = vadd.s32 %v1743, 4294967240
          %v1791 = vlaneseq
          %v1792 = vshrl.u32 %v1791, 7
          %v1793 = vsub.s32 %v1790, %v1792
          %v1794 = vrot.slane %v1717, %v1793
          %vm1795 = vcmask 523712
          %v1796 = vsel %vm1795, %v1794, %v1789
          %v1797 = vadd.s32 %v1743, 4294967232
          %v1798 = vlaneseq
          %v1799 = vshrl.u32 %v1798, 7
          %v1800 = vsub.s32 %v1797, %v1799
          %v1801 = vrot.slane %v1720, %v1800
          %vm1802 = vcmask 589312
          %v1803 = vsel %vm1802, %v1801, %v1796
          %v1804 = vadd.s32 %v1743, 4294967224
          %v1805 = vlaneseq
          %v1806 = vshrl.u32 %v1805, 7
          %v1807 = vsub.s32 %v1804, %v1806
          %v1808 = vrot.slane %v1723, %v1807
          %vm1809 = vcmask 654912
          %v1810 = vsel %vm1809, %v1808, %v1803
          %v1811 = vadd.s32 %v1743, 4294967216
          %v1812 = vlaneseq
          %v1813 = vshrl.u32 %v1812, 7
          %v1814 = vsub.s32 %v1811, %v1813
          %v1815 = vrot.slane %v1726, %v1814
          %vm1816 = vcmask 720512
          %v1817 = vsel %vm1816, %v1815, %v1810
          %v1818 = vadd.s32 %v1743, 4294967208
          %v1819 = vlaneseq
          %v1820 = vshrl.u32 %v1819, 7
          %v1821 = vsub.s32 %v1818, %v1820
          %v1822 = vrot.slane %v1729, %v1821
          %vm1823 = vcmask 786112
          %v1824 = vsel %vm1823, %v1822, %v1817
          %v1825 = vadd.s32 %v1743, 4294967200
          %v1826 = vlaneseq
          %v1827 = vshrl.u32 %v1826, 7
          %v1828 = vsub.s32 %v1825, %v1827
          %v1829 = vrot.slane %v1732, %v1828
          %vm1830 = vcmask 851712
          %v1831 = vsel %vm1830, %v1829, %v1824
          %v1832 = vadd.s32 %v1743, 4294967192
          %v1833 = vlaneseq
          %v1834 = vshrl.u32 %v1833, 7
          %v1835 = vsub.s32 %v1832, %v1834
          %v1836 = vrot.slane %v1735, %v1835
          %vm1837 = vcmask 917312
          %v1838 = vsel %vm1837, %v1836, %v1831
          %v1839 = vadd.s32 %v1743, 4294967184
          %v1840 = vlaneseq
          %v1841 = vshrl.u32 %v1840, 7
          %v1842 = vsub.s32 %v1839, %v1841
          %v1843 = vrot.slane %v1738, %v1842
          %vm1844 = vcmask 982912
          %v1845 = vsel %vm1844, %v1843, %v1838
          %v1846 = vadd.s32 %v1743, 4294967176
          %v1847 = vlaneseq
          %v1848 = vshrl.u32 %v1847, 7
          %v1849 = vsub.s32 %v1846, %v1848
          %v1850 = vrot.slane %v1741, %v1849
          %vm1851 = vcmask 1048512
          %v1852 = vsel %vm1851, %v1850, %v1845
          %v1854 = vunpack.c.l.s4 1966171168
          %v1855 = vunpack.c.0.s8 %v1854
          %v1856 = vlaneseq
          %v1857 = vshrl.u32 %v1856, 7
          %v1858 = vsub.s32 %v1855, %v1857
          %v1859 = vrot.slane %v1852, %v1858
          %v1861 = vunpack.c.l.s4 1966171168
          %v1862 = vunpack.c.0.s8 %v1861
          %v1863 = vlaneseq
          %v1864 = vshrl.u32 %v1863, 7
          %v1865 = vsub.s32 %v1862, %v1864
          %v1866 = vrot.slane %v1859, %v1865
          %v1868 = vadd.f32 %v349, %v1866
          %1869 = vst [vmem:[#allocation2] sm:$0x1] %v1868
          %p1870 = scmp.eq.s32.totalorder %s31, 1
          // Predicated region
          $region61: #{tpu_custom_call.1} parent=55 // pred_check
            %p1871 = pneg %p1870
          $region62: #{tpu_custom_call.1} parent=55 // pred_check_branch
            %1873 = sbr.rel (%p1871) target = $region64
          $region63: #{tpu_custom_call.1} parent=55 // pred_region
            %v1874 = vld [vmem:[#allocation2] sm:$0x1]
            %v1875 = vld [vmem:[%s1] sm:$0xff]
            %v1876 = vld [vmem:[%s1 + $0x8] sm:$0xff]
            %v1877 = vld [vmem:[%s1 + $0x10] sm:$0xff]
            %v1878 = vld [vmem:[%s1 + $0x18] sm:$0xff]
            %v1879 = vld [vmem:[%s1 + $0x20] sm:$0xff]
            %v1880 = vld [vmem:[%s1 + $0x28] sm:$0xff]
            %v1881 = vld [vmem:[%s1 + $0x30] sm:$0xff]
            %v1882 = vld [vmem:[%s1 + $0x38] sm:$0xff]
            %v1883 = vld [vmem:[%s1 + $0x40] sm:$0xff]
            %v1884 = vld [vmem:[%s1 + $0x48] sm:$0xff]
            %v1885 = vld [vmem:[%s1 + $0x50] sm:$0xff]
            %v1886 = vld [vmem:[%s1 + $0x58] sm:$0xff]
            %v1887 = vld [vmem:[%s1 + $0x60] sm:$0xff]
            %v1888 = vld [vmem:[%s1 + $0x68] sm:$0xff]
            %v1889 = vld [vmem:[%s1 + $0x70] sm:$0xff]
            %v1890 = vld [vmem:[%s1 + $0x78] sm:$0xff]
            %v1891 = vld [vmem:[%s2] sm:$0x1]
            %1892 = vmatprep.subr.mxu0 0.0
            %1893 = vmatpush1.msra.mxu0 %v1875
            %1894 = vmatprep.subr.mxu0 0.0
            %1895 = vmatpush1.msra.mxu0 %v1876
            %1896 = vmatprep.subr.mxu0 0.0
            %1897 = vmatpush1.msra.mxu0 %v1877
            %1898 = vmatprep.subr.mxu0 0.0
            %1899 = vmatpush1.msra.mxu0 %v1878
            %1900 = vmatprep.subr.mxu0 0.0
            %1901 = vmatpush1.msra.mxu0 %v1879
            %1902 = vmatprep.subr.mxu0 0.0
            %1903 = vmatpush1.msra.mxu0 %v1880
            %1904 = vmatprep.subr.mxu0 0.0
            %1905 = vmatpush1.msra.mxu0 %v1881
            %1906 = vmatprep.subr.mxu0 0.0
            %1907 = vmatpush1.msra.mxu0 %v1882
            %1908 = vmatprep.subr.mxu0 0.0
            %1909 = vmatpush1.msra.mxu0 %v1883
            %1910 = vmatprep.subr.mxu0 0.0
            %1911 = vmatpush1.msra.mxu0 %v1884
            %1912 = vmatprep.subr.mxu0 0.0
            %1913 = vmatpush1.msra.mxu0 %v1885
            %1914 = vmatprep.subr.mxu0 0.0
            %1915 = vmatpush1.msra.mxu0 %v1886
            %1916 = vmatprep.subr.mxu0 0.0
            %1917 = vmatpush1.msra.mxu0 %v1887
            %1918 = vmatprep.subr.mxu0 0.0
            %1919 = vmatpush1.msra.mxu0 %v1888
            %1920 = vmatprep.subr.mxu0 0.0
            %1921 = vmatpush1.msra.mxu0 %v1889
            %1922 = vmatprep.subr.mxu0 0.0
            %1923 = vmatpush1.msra.mxu0 %v1890
            %1924 = vmatprep.subr.mxu0 0.0
            %1925 = vmatpush1.msra.mxu0 0.0
            %1926 = vmatprep.subr.mxu0 0.0
            %1927 = vmatpush1.msra.mxu0 0.0
            %1928 = vmatprep.subr.mxu0 0.0
            %1929 = vmatpush1.msra.mxu0 0.0
            %1930 = vmatprep.subr.mxu0 0.0
            %1931 = vmatpush1.msra.mxu0 0.0
            %1932 = vmatprep.subr.mxu0 0.0
            %1933 = vmatpush1.msra.mxu0 0.0
            %1934 = vmatprep.subr.mxu0 0.0
            %1935 = vmatpush1.msra.mxu0 0.0
            %1936 = vmatprep.subr.mxu0 0.0
            %1937 = vmatpush1.msra.mxu0 0.0
            %1938 = vmatprep.subr.mxu0 0.0
            %1939 = vmatpush1.msra.mxu0 0.0
            %1940 = vmatprep.subr.mxu0 0.0
            %1941 = vmatpush1.msra.mxu0 0.0
            %1942 = vmatprep.subr.mxu0 0.0
            %1943 = vmatpush1.msra.mxu0 0.0
            %1944 = vmatprep.subr.mxu0 0.0
            %1945 = vmatpush1.msra.mxu0 0.0
            %1946 = vmatprep.subr.mxu0 0.0
            %1947 = vmatpush1.msra.mxu0 0.0
            %1948 = vmatprep.subr.mxu0 0.0
            %1949 = vmatpush1.msra.mxu0 0.0
            %1950 = vmatprep.subr.mxu0 0.0
            %1951 = vmatpush1.msra.mxu0 0.0
            %1952 = vmatprep.subr.mxu0 0.0
            %1953 = vmatpush1.msra.mxu0 0.0
            %1954 = vmatprep.subr.mxu0 0.0
            %1955 = vmatpush1.msra.mxu0 0.0
            %1956 = vmatprep.mubr.f32.mxu0 0.0
            %1957 = vmatmul.mubr.f32.gmra.mrb[0].mxu0 %v1874
            %v1958 = vpop.f32.mrb[0].mxu0
            %v1959 = vadd.f32 %v1891, %v1958
            %v1960 = vpop.f32.mrb[0].mxu0
            %1961 = vdwg.mxu0
            %v1962 = vmax.f32 %v1959, 0.0
            %v1963 = vld [vmem:[%s3] sm:$0xff]
            %v1964 = vld [vmem:[%s3 + $0x8] sm:$0xff]
            %v1965 = vld [vmem:[%s3 + $0x10] sm:$0xff]
            %v1966 = vld [vmem:[%s3 + $0x18] sm:$0xff]
            %v1967 = vld [vmem:[%s3 + $0x20] sm:$0xff]
            %v1968 = vld [vmem:[%s3 + $0x28] sm:$0xff]
            %v1969 = vld [vmem:[%s3 + $0x30] sm:$0xff]
            %v1970 = vld [vmem:[%s3 + $0x38] sm:$0xff]
            %v1971 = vld [vmem:[%s4] sm:$0x1]
            %vm1972 = vcmask 523264
            %v1974 = vsel %vm1972, %v1962, 0
            %1976 = vmatprep.subr.mxu0 0.0
            %1977 = vmatpush1.msra.mxu0 %v1963
            %1978 = vmatprep.subr.mxu0 0.0
            %1979 = vmatpush1.msra.mxu0 %v1964
            %1980 = vmatprep.subr.mxu0 0.0
            %1981 = vmatpush1.msra.mxu0 %v1965
            %1982 = vmatprep.subr.mxu0 0.0
            %1983 = vmatpush1.msra.mxu0 %v1966
            %1984 = vmatprep.subr.mxu0 0.0
            %1985 = vmatpush1.msra.mxu0 %v1967
            %1986 = vmatprep.subr.mxu0 0.0
            %1987 = vmatpush1.msra.mxu0 %v1968
            %1988 = vmatprep.subr.mxu0 0.0
            %1989 = vmatpush1.msra.mxu0 %v1969
            %1990 = vmatprep.subr.mxu0 0.0
            %1991 = vmatpush1.msra.mxu0 %v1970
            %1992 = vmatprep.subr.mxu0 0.0
            %1993 = vmatpush1.msra.mxu0 0.0
            %1994 = vmatprep.subr.mxu0 0.0
            %1995 = vmatpush1.msra.mxu0 0.0
            %1996 = vmatprep.subr.mxu0 0.0
            %1997 = vmatpush1.msra.mxu0 0.0
            %1998 = vmatprep.subr.mxu0 0.0
            %1999 = vmatpush1.msra.mxu0 0.0
            %2000 = vmatprep.subr.mxu0 0.0
            %2001 = vmatpush1.msra.mxu0 0.0
            %2002 = vmatprep.subr.mxu0 0.0
            %2003 = vmatpush1.msra.mxu0 0.0
            %2004 = vmatprep.subr.mxu0 0.0
            %2005 = vmatpush1.msra.mxu0 0.0
            %2006 = vmatprep.subr.mxu0 0.0
            %2007 = vmatpush1.msra.mxu0 0.0
            %2008 = vmatprep.subr.mxu0 0.0
            %2009 = vmatpush1.msra.mxu0 0.0
            %2010 = vmatprep.subr.mxu0 0.0
            %2011 = vmatpush1.msra.mxu0 0.0
            %2012 = vmatprep.subr.mxu0 0.0
            %2013 = vmatpush1.msra.mxu0 0.0
            %2014 = vmatprep.subr.mxu0 0.0
            %2015 = vmatpush1.msra.mxu0 0.0
            %2016 = vmatprep.subr.mxu0 0.0
            %2017 = vmatpush1.msra.mxu0 0.0
            %2018 = vmatprep.subr.mxu0 0.0
            %2019 = vmatpush1.msra.mxu0 0.0
            %2020 = vmatprep.subr.mxu0 0.0
            %2021 = vmatpush1.msra.mxu0 0.0
            %2022 = vmatprep.subr.mxu0 0.0
            %2023 = vmatpush1.msra.mxu0 0.0
            %2024 = vmatprep.subr.mxu0 0.0
            %2025 = vmatpush1.msra.mxu0 0.0
            %2026 = vmatprep.subr.mxu0 0.0
            %2027 = vmatpush1.msra.mxu0 0.0
            %2028 = vmatprep.subr.mxu0 0.0
            %2029 = vmatpush1.msra.mxu0 0.0
            %2030 = vmatprep.subr.mxu0 0.0
            %2031 = vmatpush1.msra.mxu0 0.0
            %2032 = vmatprep.subr.mxu0 0.0
            %2033 = vmatpush1.msra.mxu0 0.0
            %2034 = vmatprep.subr.mxu0 0.0
            %2035 = vmatpush1.msra.mxu0 0.0
            %2036 = vmatprep.subr.mxu0 0.0
            %2037 = vmatpush1.msra.mxu0 0.0
            %2038 = vmatprep.subr.mxu0 0.0
            %2039 = vmatpush1.msra.mxu0 0.0
            %2040 = vmatprep.mubr.f32.mxu0 0.0
            %2041 = vmatmul.mubr.f32.gmra.mrb[0].mxu0 %v1974
            %v2042 = vpop.f32.mrb[0].mxu0
            %v2043 = vadd.f32 %v1971, %v2042
            %v2044 = vpop.f32.mrb[0].mxu0
            %2045 = vdwg.mxu0
            %v2046 = vmax.f32 %v2043, 0.0
            %v2047 = vmin.f32 %v2046, 1.0
            %v2048 = vld [vmem:[%s5] sm:$0xff]
            %v2049 = vld [vmem:[%s5 + $0x8] sm:$0xff]
            %v2050 = vld [vmem:[%s5 + $0x10] sm:$0xff]
            %v2051 = vld [vmem:[%s5 + $0x18] sm:$0xff]
            %v2052 = vld [vmem:[%s5 + $0x20] sm:$0xff]
            %v2053 = vld [vmem:[%s5 + $0x28] sm:$0xff]
            %v2054 = vld [vmem:[%s5 + $0x30] sm:$0xff]
            %v2055 = vld [vmem:[%s5 + $0x38] sm:$0xff]
            %v2056 = vld [vmem:[%s5 + $0x40] sm:$0xff]
            %v2057 = vld [vmem:[%s5 + $0x48] sm:$0xff]
            %v2058 = vld [vmem:[%s5 + $0x50] sm:$0xff]
            %v2059 = vld [vmem:[%s5 + $0x58] sm:$0xff]
            %v2060 = vld [vmem:[%s5 + $0x60] sm:$0xff]
            %v2061 = vld [vmem:[%s5 + $0x68] sm:$0xff]
            %v2062 = vld [vmem:[%s5 + $0x70] sm:$0xff]
            %v2063 = vld [vmem:[%s5 + $0x78] sm:$0xff]
            %v2064 = vlaneseq
            %v2065 = vshrl.u32 %v2064, 7
            %v2066 = vsub.s32 0, %v2065
            %v2067 = vrot.slane %v2047, %v2066
            %v2068 = vmul.f32 %v2048, %v2067
            %v2069 = vmul.f32 %v2049, %v2067
            %v2070 = vmul.f32 %v2050, %v2067
            %v2071 = vmul.f32 %v2051, %v2067
            %v2072 = vmul.f32 %v2052, %v2067
            %v2073 = vmul.f32 %v2053, %v2067
            %v2074 = vmul.f32 %v2054, %v2067
            %v2075 = vmul.f32 %v2055, %v2067
            %v2076 = vmul.f32 %v2056, %v2067
            %v2077 = vmul.f32 %v2057, %v2067
            %v2078 = vmul.f32 %v2058, %v2067
            %v2079 = vmul.f32 %v2059, %v2067
            %v2080 = vmul.f32 %v2060, %v2067
            %v2081 = vmul.f32 %v2061, %v2067
            %v2082 = vmul.f32 %v2062, %v2067
            %v2083 = vmul.f32 %v2063, %v2067
            %2084 = vst [vmem:[#allocation3] sm:$0xff] %v2068
            %2085 = vst [vmem:[#allocation3 + $0x8] sm:$0xff] %v2069
            %2086 = vst [vmem:[#allocation3 + $0x10] sm:$0xff] %v2070
            %2087 = vst [vmem:[#allocation3 + $0x18] sm:$0xff] %v2071
            %2088 = vst [vmem:[#allocation3 + $0x20] sm:$0xff] %v2072
            %2089 = vst [vmem:[#allocation3 + $0x28] sm:$0xff] %v2073
            %2090 = vst [vmem:[#allocation3 + $0x30] sm:$0xff] %v2074
            %2091 = vst [vmem:[#allocation3 + $0x38] sm:$0xff] %v2075
            %2092 = vst [vmem:[#allocation3 + $0x40] sm:$0xff] %v2076
            %2093 = vst [vmem:[#allocation3 + $0x48] sm:$0xff] %v2077
            %2094 = vst [vmem:[#allocation3 + $0x50] sm:$0xff] %v2078
            %2095 = vst [vmem:[#allocation3 + $0x58] sm:$0xff] %v2079
            %2096 = vst [vmem:[#allocation3 + $0x60] sm:$0xff] %v2080
            %2097 = vst [vmem:[#allocation3 + $0x68] sm:$0xff] %v2081
            %2098 = vst [vmem:[#allocation3 + $0x70] sm:$0xff] %v2082
            %2099 = vst [vmem:[#allocation3 + $0x78] sm:$0xff] %v2083
          $region64: #{tpu_custom_call.1} parent=55 // pred_fallthru
            _
        $region56: #{tpu_custom_call.1} parent=47 // pred_fallthru
          _
        %p2100 = scmp.eq.s32.totalorder %s30, 1
        // Predicated region
        $region65: #{tpu_custom_call.1} parent=47 // pred_check
          %p2101 = pneg %p2100
        $region66: #{tpu_custom_call.1} parent=47 // pred_check_branch
          %2103 = sbr.rel (%p2101) target = $region68
        $region67: #{tpu_custom_call.1} parent=47 // pred_region
          %v2104 = vld [vmem:[%s292] sm:$0xff]
          %v2105 = vld [vmem:[%s292 + $0x8] sm:$0xff]
          %v2106 = vld [vmem:[%s292 + $0x10] sm:$0xff]
          %v2107 = vld [vmem:[%s292 + $0x18] sm:$0xff]
          %v2108 = vld [vmem:[%s292 + $0x20] sm:$0xff]
          %v2109 = vld [vmem:[%s292 + $0x28] sm:$0xff]
          %v2110 = vld [vmem:[%s292 + $0x30] sm:$0xff]
          %v2111 = vld [vmem:[%s292 + $0x38] sm:$0xff]
          %v2112 = vld [vmem:[%s292 + $0x40] sm:$0xff]
          %v2113 = vld [vmem:[%s292 + $0x48] sm:$0xff]
          %v2114 = vld [vmem:[%s292 + $0x50] sm:$0xff]
          %v2115 = vld [vmem:[%s292 + $0x58] sm:$0xff]
          %v2116 = vld [vmem:[%s292 + $0x60] sm:$0xff]
          %v2117 = vld [vmem:[%s292 + $0x68] sm:$0xff]
          %v2118 = vld [vmem:[%s292 + $0x70] sm:$0xff]
          %v2119 = vld [vmem:[%s292 + $0x78] sm:$0xff]
          %v2120 = vld [vmem:[#allocation3] sm:$0xff]
          %v2121 = vld [vmem:[#allocation3 + $0x8] sm:$0xff]
          %v2122 = vld [vmem:[#allocation3 + $0x10] sm:$0xff]
          %v2123 = vld [vmem:[#allocation3 + $0x18] sm:$0xff]
          %v2124 = vld [vmem:[#allocation3 + $0x20] sm:$0xff]
          %v2125 = vld [vmem:[#allocation3 + $0x28] sm:$0xff]
          %v2126 = vld [vmem:[#allocation3 + $0x30] sm:$0xff]
          %v2127 = vld [vmem:[#allocation3 + $0x38] sm:$0xff]
          %v2128 = vld [vmem:[#allocation3 + $0x40] sm:$0xff]
          %v2129 = vld [vmem:[#allocation3 + $0x48] sm:$0xff]
          %v2130 = vld [vmem:[#allocation3 + $0x50] sm:$0xff]
          %v2131 = vld [vmem:[#allocation3 + $0x58] sm:$0xff]
          %v2132 = vld [vmem:[#allocation3 + $0x60] sm:$0xff]
          %v2133 = vld [vmem:[#allocation3 + $0x68] sm:$0xff]
          %v2134 = vld [vmem:[#allocation3 + $0x70] sm:$0xff]
          %v2135 = vld [vmem:[#allocation3 + $0x78] sm:$0xff]
          %v2136 = vld [vmem:[%s6] sm:$0xff]
          %v2137 = vld [vmem:[%s6 + $0x8] sm:$0xff]
          %v2138 = vld [vmem:[%s6 + $0x10] sm:$0xff]
          %v2139 = vld [vmem:[%s6 + $0x18] sm:$0xff]
          %v2140 = vld [vmem:[%s6 + $0x20] sm:$0xff]
          %v2141 = vld [vmem:[%s6 + $0x28] sm:$0xff]
          %v2142 = vld [vmem:[%s6 + $0x30] sm:$0xff]
          %v2143 = vld [vmem:[%s6 + $0x38] sm:$0xff]
          %v2144 = vld [vmem:[%s6 + $0x40] sm:$0xff]
          %v2145 = vld [vmem:[%s6 + $0x48] sm:$0xff]
          %v2146 = vld [vmem:[%s6 + $0x50] sm:$0xff]
          %v2147 = vld [vmem:[%s6 + $0x58] sm:$0xff]
          %v2148 = vld [vmem:[%s6 + $0x60] sm:$0xff]
          %v2149 = vld [vmem:[%s6 + $0x68] sm:$0xff]
          %v2150 = vld [vmem:[%s6 + $0x70] sm:$0xff]
          %v2151 = vld [vmem:[%s6 + $0x78] sm:$0xff]
          %2153 = vset.pattern.permute.xlu0 0
          %2154 = vperm.xlu0 %2153, %v2136
          %v2155 = vpop.permute.xlu0 %2154
          %2158 = vset.pattern.permute.xlu0 0
          %2159 = vperm.xlu0 %2158, %v2137
          %v2160 = vpop.permute.xlu0 %2159
          %2163 = vset.pattern.permute.xlu0 0
          %2164 = vperm.xlu0 %2163, %v2138
          %v2165 = vpop.permute.xlu0 %2164
          %2168 = vset.pattern.permute.xlu0 0
          %2169 = vperm.xlu0 %2168, %v2139
          %v2170 = vpop.permute.xlu0 %2169
          %2173 = vset.pattern.permute.xlu0 0
          %2174 = vperm.xlu0 %2173, %v2140
          %v2175 = vpop.permute.xlu0 %2174
          %2178 = vset.pattern.permute.xlu0 0
          %2179 = vperm.xlu0 %2178, %v2141
          %v2180 = vpop.permute.xlu0 %2179
          %2183 = vset.pattern.permute.xlu0 0
          %2184 = vperm.xlu0 %2183, %v2142
          %v2185 = vpop.permute.xlu0 %2184
          %2188 = vset.pattern.permute.xlu0 0
          %2189 = vperm.xlu0 %2188, %v2143
          %v2190 = vpop.permute.xlu0 %2189
          %2193 = vset.pattern.permute.xlu0 0
          %2194 = vperm.xlu0 %2193, %v2144
          %v2195 = vpop.permute.xlu0 %2194
          %2198 = vset.pattern.permute.xlu0 0
          %2199 = vperm.xlu0 %2198, %v2145
          %v2200 = vpop.permute.xlu0 %2199
          %2203 = vset.pattern.permute.xlu0 0
          %2204 = vperm.xlu0 %2203, %v2146
          %v2205 = vpop.permute.xlu0 %2204
          %2208 = vset.pattern.permute.xlu0 0
          %2209 = vperm.xlu0 %2208, %v2147
          %v2210 = vpop.permute.xlu0 %2209
          %2213 = vset.pattern.permute.xlu0 0
          %2214 = vperm.xlu0 %2213, %v2148
          %v2215 = vpop.permute.xlu0 %2214
          %2218 = vset.pattern.permute.xlu0 0
          %2219 = vperm.xlu0 %2218, %v2149
          %v2220 = vpop.permute.xlu0 %2219
          %2223 = vset.pattern.permute.xlu0 0
          %2224 = vperm.xlu0 %2223, %v2150
          %v2225 = vpop.permute.xlu0 %2224
          %2228 = vset.pattern.permute.xlu0 0
          %2229 = vperm.xlu0 %2228, %v2151
          %v2230 = vpop.permute.xlu0 %2229
          %2232 = vmatprep.subr.mxu0 0.0
          %2233 = vmatpush1.msra.mxu0 %v2104
          %2234 = vmatprep.subr.mxu0 0.0
          %2235 = vmatpush1.msra.mxu0 %v2105
          %2236 = vmatprep.subr.mxu0 0.0
          %2237 = vmatpush1.msra.mxu0 %v2106
          %2238 = vmatprep.subr.mxu0 0.0
          %2239 = vmatpush1.msra.mxu0 %v2107
          %2240 = vmatprep.subr.mxu0 0.0
          %2241 = vmatpush1.msra.mxu0 %v2108
          %2242 = vmatprep.subr.mxu0 0.0
          %2243 = vmatpush1.msra.mxu0 %v2109
          %2244 = vmatprep.subr.mxu0 0.0
          %2245 = vmatpush1.msra.mxu0 %v2110
          %2246 = vmatprep.subr.mxu0 0.0
          %2247 = vmatpush1.msra.mxu0 %v2111
          %2248 = vmatprep.subr.mxu0 0.0
          %2249 = vmatpush1.msra.mxu0 %v2112
          %2250 = vmatprep.subr.mxu0 0.0
          %2251 = vmatpush1.msra.mxu0 %v2113
          %2252 = vmatprep.subr.mxu0 0.0
          %2253 = vmatpush1.msra.mxu0 %v2114
          %2254 = vmatprep.subr.mxu0 0.0
          %2255 = vmatpush1.msra.mxu0 %v2115
          %2256 = vmatprep.subr.mxu0 0.0
          %2257 = vmatpush1.msra.mxu0 %v2116
          %2258 = vmatprep.subr.mxu0 0.0
          %2259 = vmatpush1.msra.mxu0 %v2117
          %2260 = vmatprep.subr.mxu0 0.0
          %2261 = vmatpush1.msra.mxu0 %v2118
          %2262 = vmatprep.subr.mxu0 0.0
          %2263 = vmatpush1.msra.mxu0 %v2119
          %2264 = vmatprep.subr.mxu0 0.0
          %2265 = vmatpush1.msra.mxu0 0.0
          %2266 = vmatprep.subr.mxu0 0.0
          %2267 = vmatpush1.msra.mxu0 0.0
          %2268 = vmatprep.subr.mxu0 0.0
          %2269 = vmatpush1.msra.mxu0 0.0
          %2270 = vmatprep.subr.mxu0 0.0
          %2271 = vmatpush1.msra.mxu0 0.0
          %2272 = vmatprep.subr.mxu0 0.0
          %2273 = vmatpush1.msra.mxu0 0.0
          %2274 = vmatprep.subr.mxu0 0.0
          %2275 = vmatpush1.msra.mxu0 0.0
          %2276 = vmatprep.subr.mxu0 0.0
          %2277 = vmatpush1.msra.mxu0 0.0
          %2278 = vmatprep.subr.mxu0 0.0
          %2279 = vmatpush1.msra.mxu0 0.0
          %2280 = vmatprep.subr.mxu0 0.0
          %2281 = vmatpush1.msra.mxu0 0.0
          %2282 = vmatprep.subr.mxu0 0.0
          %2283 = vmatpush1.msra.mxu0 0.0
          %2284 = vmatprep.subr.mxu0 0.0
          %2285 = vmatpush1.msra.mxu0 0.0
          %2286 = vmatprep.subr.mxu0 0.0
          %2287 = vmatpush1.msra.mxu0 0.0
          %2288 = vmatprep.subr.mxu0 0.0
          %2289 = vmatpush1.msra.mxu0 0.0
          %2290 = vmatprep.subr.mxu0 0.0
          %2291 = vmatpush1.msra.mxu0 0.0
          %2292 = vmatprep.subr.mxu0 0.0
          %2293 = vmatpush1.msra.mxu0 0.0
          %2294 = vmatprep.subr.mxu0 0.0
          %2295 = vmatpush1.msra.mxu0 0.0
          %2296 = vmatprep.mubr.f32.mxu0 0.0
          %2297 = vmatmul.mubr.f32.gmra.mrb[0].mxu0 %v2120
          %v2298 = vpop.f32.mrb[0].mxu0
          %v2299 = vadd.f32 %v2155, %v2298
          %v2300 = vpop.f32.mrb[0].mxu0
          %2301 = vmatprep.mubr.f32.mxu0 0.0
          %2302 = vmatmul.mubr.f32.gmra.mrb[0].mxu0 %v2121
          %v2303 = vpop.f32.mrb[0].mxu0
          %v2304 = vadd.f32 %v2160, %v2303
          %v2305 = vpop.f32.mrb[0].mxu0
          %2306 = vmatprep.mubr.f32.mxu0 0.0
          %2307 = vmatmul.mubr.f32.gmra.mrb[0].mxu0 %v2122
          %v2308 = vpop.f32.mrb[0].mxu0
          %v2309 = vadd.f32 %v2165, %v2308
          %v2310 = vpop.f32.mrb[0].mxu0
          %2311 = vmatprep.mubr.f32.mxu0 0.0
          %2312 = vmatmul.mubr.f32.gmra.mrb[0].mxu0 %v2123
          %v2313 = vpop.f32.mrb[0].mxu0
          %v2314 = vadd.f32 %v2170, %v2313
          %v2315 = vpop.f32.mrb[0].mxu0
          %2316 = vmatprep.mubr.f32.mxu0 0.0
          %2317 = vmatmul.mubr.f32.gmra.mrb[0].mxu0 %v2124
          %v2318 = vpop.f32.mrb[0].mxu0
          %v2319 = vadd.f32 %v2175, %v2318
          %v2320 = vpop.f32.mrb[0].mxu0
          %2321 = vmatprep.mubr.f32.mxu0 0.0
          %2322 = vmatmul.mubr.f32.gmra.mrb[0].mxu0 %v2125
          %v2323 = vpop.f32.mrb[0].mxu0
          %v2324 = vadd.f32 %v2180, %v2323
          %v2325 = vpop.f32.mrb[0].mxu0
          %2326 = vmatprep.mubr.f32.mxu0 0.0
          %2327 = vmatmul.mubr.f32.gmra.mrb[0].mxu0 %v2126
          %v2328 = vpop.f32.mrb[0].mxu0
          %v2329 = vadd.f32 %v2185, %v2328
          %v2330 = vpop.f32.mrb[0].mxu0
          %2331 = vmatprep.mubr.f32.mxu0 0.0
          %2332 = vmatmul.mubr.f32.gmra.mrb[0].mxu0 %v2127
          %v2333 = vpop.f32.mrb[0].mxu0
          %v2334 = vadd.f32 %v2190, %v2333
          %v2335 = vpop.f32.mrb[0].mxu0
          %2336 = vmatprep.mubr.f32.mxu0 0.0
          %2337 = vmatmul.mubr.f32.gmra.mrb[0].mxu0 %v2128
          %v2338 = vpop.f32.mrb[0].mxu0
          %v2339 = vadd.f32 %v2195, %v2338
          %v2340 = vpop.f32.mrb[0].mxu0
          %2341 = vmatprep.mubr.f32.mxu0 0.0
          %2342 = vmatmul.mubr.f32.gmra.mrb[0].mxu0 %v2129
          %v2343 = vpop.f32.mrb[0].mxu0
          %v2344 = vadd.f32 %v2200, %v2343
          %v2345 = vpop.f32.mrb[0].mxu0
          %2346 = vmatprep.mubr.f32.mxu0 0.0
          %2347 = vmatmul.mubr.f32.gmra.mrb[0].mxu0 %v2130
          %v2348 = vpop.f32.mrb[0].mxu0
          %v2349 = vadd.f32 %v2205, %v2348
          %v2350 = vpop.f32.mrb[0].mxu0
          %2351 = vmatprep.mubr.f32.mxu0 0.0
          %2352 = vmatmul.mubr.f32.gmra.mrb[0].mxu0 %v2131
          %v2353 = vpop.f32.mrb[0].mxu0
          %v2354 = vadd.f32 %v2210, %v2353
          %v2355 = vpop.f32.mrb[0].mxu0
          %2356 = vmatprep.mubr.f32.mxu0 0.0
          %2357 = vmatmul.mubr.f32.gmra.mrb[0].mxu0 %v2132
          %v2358 = vpop.f32.mrb[0].mxu0
          %v2359 = vadd.f32 %v2215, %v2358
          %v2360 = vpop.f32.mrb[0].mxu0
          %2361 = vmatprep.mubr.f32.mxu0 0.0
          %2362 = vmatmul.mubr.f32.gmra.mrb[0].mxu0 %v2133
          %v2363 = vpop.f32.mrb[0].mxu0
          %v2364 = vadd.f32 %v2220, %v2363
          %v2365 = vpop.f32.mrb[0].mxu0
          %2366 = vmatprep.mubr.f32.mxu0 0.0
          %2367 = vmatmul.mubr.f32.gmra.mrb[0].mxu0 %v2134
          %v2368 = vpop.f32.mrb[0].mxu0
          %v2369 = vadd.f32 %v2225, %v2368
          %v2370 = vpop.f32.mrb[0].mxu0
          %2371 = vmatprep.mubr.f32.mxu0 0.0
          %2372 = vmatmul.mubr.f32.gmra.mrb[0].mxu0 %v2135
          %v2373 = vpop.f32.mrb[0].mxu0
          %v2374 = vadd.f32 %v2230, %v2373
          %v2375 = vpop.f32.mrb[0].mxu0
          %2376 = vdwg.mxu0
          %2377 = vst [vmem:[%s322] sm:$0xff] %v2299
          %2378 = vst [vmem:[%s322 + $0x8] sm:$0xff] %v2304
          %2379 = vst [vmem:[%s322 + $0x10] sm:$0xff] %v2309
          %2380 = vst [vmem:[%s322 + $0x18] sm:$0xff] %v2314
          %2381 = vst [vmem:[%s322 + $0x20] sm:$0xff] %v2319
          %2382 = vst [vmem:[%s322 + $0x28] sm:$0xff] %v2324
          %2383 = vst [vmem:[%s322 + $0x30] sm:$0xff] %v2329
          %2384 = vst [vmem:[%s322 + $0x38] sm:$0xff] %v2334
          %2385 = vst [vmem:[%s322 + $0x40] sm:$0xff] %v2339
          %2386 = vst [vmem:[%s322 + $0x48] sm:$0xff] %v2344
          %2387 = vst [vmem:[%s322 + $0x50] sm:$0xff] %v2349
          %2388 = vst [vmem:[%s322 + $0x58] sm:$0xff] %v2354
          %2389 = vst [vmem:[%s322 + $0x60] sm:$0xff] %v2359
          %2390 = vst [vmem:[%s322 + $0x68] sm:$0xff] %v2364
          %2391 = vst [vmem:[%s322 + $0x70] sm:$0xff] %v2369
          %2392 = vst [vmem:[%s322 + $0x78] sm:$0xff] %v2374
        $region68: #{tpu_custom_call.1} parent=47 // pred_fallthru
          _
        %s2393 = sand.u32 %s209, 1
        %s2394 = scalar_lea.sflag [#allocation6], %s2393
        %s2395 = sand.u32 %s209, 1
        %s2396 = smul.addr %s2395, 128
        %s2397 = scalar_lea.vmem [#allocation7], %s2396
        // Predicated region
        $region69: #{tpu_custom_call.1} parent=47 // pred_check
          %p2398 = pneg %p219
        $region70: #{tpu_custom_call.1} parent=47 // pred_check_branch
          %2400 = sbr.rel (%p2398) target = $region72
        $region71: #{tpu_custom_call.1} parent=47 // pred_region
          %s2401 = smul.u32 %s31, %s30
          %s2403 = ssub.s32 2048, 2048
          %2404 = vsyncadd %s2394, %s2403
          %s2405 = smul.addr %s29, 32
          %s2406 = sadd.s32 %s2401, %s2405
          %s2407 = smul.addr %s2406, 128
          %s2408 = scalar_lea.hbm %s7, %s2407
          %s2409 = sshll.u32 %s2397, 4
          %s2410 = int_to_ptr.vmem [resolvable:$true] %s2409
          %2415 = dma.vmem_to_hbm [thread:$0]  %s2410, 2048, %s2408, %s2394, 128, 256, 8
        $region72: #{tpu_custom_call.1} parent=47 // pred_fallthru
          _
      $region48: #{tpu_custom_call.1} parent=5 // pred_fallthru
        _
      %p2416 = scmp.le.s32.totalorder 2, %s19
      // Predicated region
      $region73: #{tpu_custom_call.1} parent=5 // pred_check
        %p2417 = pneg %p2416
      $region74: #{tpu_custom_call.1} parent=5 // pred_check_branch
        %2419 = sbr.rel (%p2417) target = $region76
      $region75: #{tpu_custom_call.1} parent=5 // pred_region
        %s2420 = ssub.s32 %s19, 2
        // Predicated region
        $region77: #{tpu_custom_call.1} parent=75 // pred_check
          %p2421 = pneg %p225
        $region78: #{tpu_custom_call.1} parent=75 // pred_check_branch
          %2423 = sbr.rel (%p2421) target = $region80
        $region79: #{tpu_custom_call.1} parent=75 // pred_region
          %s2424 = sand.u32 %s210, 1
          %s2425 = scalar_lea.sflag [#allocation6], %s2424
          %s2426 = sand.u32 %s210, 1
          %s2427 = smul.addr %s2426, 128
          %s2428 = scalar_lea.vmem [#allocation7], %s2427
          %2429 = dma.done %s2425, 2048
        $region80: #{tpu_custom_call.1} parent=75 // pred_fallthru
          _
      $region76: #{tpu_custom_call.1} parent=5 // pred_fallthru
        _
    $region6: #{tpu_custom_call.1} parent=1 // loop_footer
      %s23 = sadd.s32 1, %s19
    $region7: #{tpu_custom_call.1} parent=1 // loop_footer_branch
      %18 = sbr.rel target = $region3
    $region8: #{tpu_custom_call.1} parent=1 // loop_exit
      _
    %2430 = vsyncpa [#allocation5], 1
    %s2431 = scalar_lea.sflag [#allocation5], 1
    %2432 = vsyncpa %s2431, 1
    %2433 = vsyncpa [#allocation6], 1
    %s2434 = scalar_lea.sflag [#allocation6], 1
    %2435 = vsyncpa %s2434, 1

</llo_original>
